<compile_context>
chip_gen: v6e
topology: v6e:2x2x1
jax: 0.10.0
libtpu: 0.0.40
codegen_flags: <defaults>
</compile_context>

<pallas_src>
import functools

import jax
import jax.numpy as jnp
from jax.experimental import pallas as pl
from jax.experimental.pallas import tpu as pltpu


def _gelu_exact(x):
    # nn.GELU default = exact erf-based GELU
    return 0.5 * x * (1.0 + jax.lax.erf(x * (2.0 ** -0.5)))


def _layernorm(x, gamma, beta, eps=1e-5):
    mu = jnp.mean(x, axis=-1, keepdims=True)
    var = jnp.mean((x - mu) ** 2, axis=-1, keepdims=True)
    return (x - mu) * jax.lax.rsqrt(var + eps) * gamma + beta


def _block_kernel(
    x_ref,                    # (1, N, C)  f32
    ln1_w_ref, ln1_b_ref,     # (1, C)     f32
    wq_ref, wk_ref, wv_ref,   # (h, C, d)  bf16  (attn scale folded into wq)
    wproj_ref, bproj_ref,     # (h, d, C)  bf16, (1, C) f32
    ln2_w_ref, ln2_b_ref,     # (1, C)     f32
    w1_ref, b1_ref,           # (C, H)     bf16, (1, H) f32
    w2_ref, b2_ref,           # (H, C)     bf16, (1, C) f32
    o_ref,                    # (1, N, C)  f32
    *, num_heads,
):
    f32 = jnp.float32
    bf16 = jnp.bfloat16

    x = x_ref[0]                                   # (N, C) f32
    n_tok, dim = x.shape

    # ---- norm1 (f32) ----
    xn = _layernorm(x, ln1_w_ref[0], ln1_b_ref[0])

    # ---- attention: all heads in batched einsums, head axis leading ----
    xh = jnp.broadcast_to(xn.astype(bf16)[None], (num_heads, n_tok, dim))
    q = jnp.einsum('hnc,hcd->hnd', xh, wq_ref[...], preferred_element_type=f32)
    k = jnp.einsum('hnc,hcd->hnd', xh, wk_ref[...], preferred_element_type=f32)
    v = jnp.einsum('hnc,hcd->hnd', xh, wv_ref[...], preferred_element_type=f32)

    # scores: contract head_dim of both operands directly (no explicit k.T);
    # scale already folded into wq on the host.
    s = jnp.einsum('hqd,hkd->hqk', q.astype(bf16), k.astype(bf16),
                   preferred_element_type=f32)               # (h, N, N) f32
    s = s - jnp.max(s, axis=-1, keepdims=True)
    p = jnp.exp(s)
    p = p * pl.reciprocal(jnp.sum(p, axis=-1, keepdims=True), approx=True)

    o = jnp.einsum('hqk,hkd->hqd', p.astype(bf16), v.astype(bf16),
                   preferred_element_type=f32)               # (h, N, d) f32

    # output projection: per-head contributions summed (replaces concat + matmul)
    yh = jnp.einsum('hnd,hdc->hnc', o.astype(bf16), wproj_ref[...],
                    preferred_element_type=f32)              # (h, N, C) f32
    y = jnp.sum(yh, axis=0) + bproj_ref[0]                   # (N, C)

    # ---- residual 1 (drop_path = identity) ----
    x1 = x + y

    # ---- norm2 + MLP (bf16 matmul operands, f32 elementwise) ----
    xn2 = _layernorm(x1, ln2_w_ref[0], ln2_b_ref[0])
    h1 = jnp.dot(xn2.astype(bf16), w1_ref[...], preferred_element_type=f32) + b1_ref[0]
    h1 = _gelu_exact(h1)
    h2 = jnp.dot(h1.astype(bf16), w2_ref[...], preferred_element_type=f32) + b2_ref[0]

    # ---- residual 2 ----
    o_ref[0] = x1 + h2


def block_forward(x, params, num_heads):
    B, N, C = x.shape
    H = params["w1"].shape[1]
    head_dim = C // num_heads
    scale = head_dim ** (-0.5)

    f32, bf16 = jnp.float32, jnp.bfloat16

    # ---- host-side weight prep (one-time layout work, zero kernel cost) ----
    wqkv = params["wqkv"].astype(f32)                              # (C, 3C)

    def _heads(w):                                                 # (C, C) -> (h, C, d)
        return w.reshape(C, num_heads, head_dim).transpose(1, 0, 2)

    wq = (_heads(wqkv[:, 0 * C:1 * C]) * scale).astype(bf16)       # fold attn scale into q
    wk = _heads(wqkv[:, 1 * C:2 * C]).astype(bf16)
    wv = _heads(wqkv[:, 2 * C:3 * C]).astype(bf16)
    wproj_h = params["wproj"].astype(f32).reshape(num_heads, head_dim, C).astype(bf16)
    w1 = params["w1"].astype(bf16)
    w2 = params["w2"].astype(bf16)

    kernel = functools.partial(_block_kernel, num_heads=num_heads)
    # Weight BlockSpecs have constant index maps (resident across the grid).
    # On v7x one could add pipeline_mode=pl.Buffered(1) to single-buffer them;
    # left at the default here for portability across generations.
    full = lambda shape: pl.BlockSpec(shape, lambda b: (0,) * len(shape))

    # Scoped-VMEM budget: double-buffered blocks + in-kernel intermediates,
    # with ~2x headroom; clamped to a range that is safe on v5e/v6e/v7x.
    blk_bytes = (
        2 * N * C * 4                                  # x block + out block (f32)
        + (4 * C * C + C * H + H * C) * 2              # bf16 weights
        + (6 * C + H) * 4                              # LN params + biases (f32)
    )
    interm_bytes = (
        3 * num_heads * N * head_dim + 2 * num_heads * N * N
        + num_heads * N * C + 8 * N * C + 2 * N * H
    ) * 4
    vmem_limit = int(min(32 * 2 ** 20,
                         max(8 * 2 ** 20, 2 * (2 * blk_bytes + interm_bytes))))

    return pl.pallas_call(
        kernel,
        out_shape=jax.ShapeDtypeStruct((B, N, C), f32),
        grid=(B,),
        in_specs=[
            pl.BlockSpec((1, N, C), lambda b: (b, 0, 0)),          # x
            full((1, C)), full((1, C)),                            # ln1 gamma/beta
            full((num_heads, C, head_dim)),                        # wq (pre-scaled)
            full((num_heads, C, head_dim)),                        # wk
            full((num_heads, C, head_dim)),                        # wv
            full((num_heads, head_dim, C)), full((1, C)),          # proj w, b
            full((1, C)), full((1, C)),                            # ln2 gamma/beta
            full((C, H)), full((1, H)),                            # fc1 w, b
            full((H, C)), full((1, C)),                            # fc2 w, b
        ],
        out_specs=pl.BlockSpec((1, N, C), lambda b: (b, 0, 0)),
        compiler_params=pltpu.CompilerParams(
            dimension_semantics=("parallel",),    # batch axis -> both v7x TCs
            vmem_limit_bytes=vmem_limit,
        ),
    )(
        x.astype(f32),
        params["ln1_w"], params["ln1_b"],
        wq, wk, wv,
        wproj_h, params["bproj"],
        params["ln2_w"], params["ln2_b"],
        w1, params["b1"],
        w2, params["b2"],
    )
    # TODO(synk): for ViT-scale N, add an N-tile grid axis with online-softmax
    # accumulators (pl.when init/finalize + VMEM scratch) so the N x N scores
    # and N x H hidden activation never fully materialize.


def _reference(x, p, num_heads):
    """Pure-JAX f32 reference matching the PyTorch Block forward (eval mode)."""
    B, N, C = x.shape
    hd = C // num_heads
    scale = hd ** (-0.5)

    def ln(v, g, b):
        mu = jnp.mean(v, -1, keepdims=True)
        var = jnp.mean((v - mu) ** 2, -1, keepdims=True)
        return (v - mu) / jnp.sqrt(var + 1e-5) * g[0] + b[0]

    xn = ln(x, p["ln1_w"], p["ln1_b"])
    qkv = xn @ p["wqkv"]                                # (B, N, 3C)
    qkv = qkv.reshape(B, N, 3, num_heads, hd).transpose(2, 0, 3, 1, 4)
    q, k, v = qkv[0], qkv[1], qkv[2]                    # (B, h, N, hd)
    attn = jax.nn.softmax((q @ jnp.swapaxes(k, -2, -1)) * scale, axis=-1)
    y = (attn @ v).transpose(0, 2, 1, 3).reshape(B, N, C)
    y = y @ p["wproj"] + p["bproj"][0]
    x1 = x + y
    xn2 = ln(x1, p["ln2_w"], p["ln2_b"])
    h1 = jax.nn.gelu(xn2 @ p["w1"] + p["b1"][0], approximate=False)
    h2 = h1 @ p["w2"] + p["b2"][0]
    return x1 + h2


if __name__ == "__main__":
    # Small shapes consistent with the module: B=2 batch, N=8 tokens, dim=32,
    # num_heads=4 (head_dim=8), mlp_ratio=4 -> hidden=128.
    B, N, C = 2, 8, 32
    num_heads = 4
    H = int(C * 4.0)

    key = jax.random.PRNGKey(0)
    keys = jax.random.split(key, 8)

    params = {
        "ln1_w": jnp.ones((1, C), jnp.float32),
        "ln1_b": jnp.zeros((1, C), jnp.float32),
        "wqkv": 0.02 * jax.random.normal(keys[0], (C, 3 * C), jnp.float32),
        "wproj": 0.02 * jax.random.normal(keys[1], (C, C), jnp.float32),
        "bproj": 0.01 * jax.random.normal(keys[2], (1, C), jnp.float32),
        "ln2_w": jnp.ones((1, C), jnp.float32),
        "ln2_b": jnp.zeros((1, C), jnp.float32),
        "w1": 0.02 * jax.random.normal(keys[3], (C, H), jnp.float32),
        "b1": 0.01 * jax.random.normal(keys[4], (1, H), jnp.float32),
        "w2": 0.02 * jax.random.normal(keys[5], (H, C), jnp.float32),
        "b2": 0.01 * jax.random.normal(keys[6], (1, C), jnp.float32),
    }

    x = jax.random.normal(keys[7], (B, N, C), jnp.float32)

    out = block_forward(x, params, num_heads)
    out = jax.block_until_ready(out)

    ref = _reference(x, params, num_heads)
    # bf16 matmul operands + approximate softmax reciprocal -> loosened tolerance
    # (accumulation / softmax / norms remain f32, so errors stay ~1e-3 level).
    assert jnp.allclose(out, ref, atol=2e-2, rtol=2e-2), (
        float(jnp.max(jnp.abs(out - ref))))

    print("KERNEL_OK")
</pallas_src>

<mosaic_0001>
module attributes {stable_mosaic.version = 11 : i64} {
  func.func @_block_kernel(%arg0: i32, %arg1: memref<1x8x32xf32, #tpu.memory_space<vmem>>, %arg2: memref<1x32xf32, #tpu.memory_space<vmem>>, %arg3: memref<1x32xf32, #tpu.memory_space<vmem>>, %arg4: memref<4x32x8xbf16, #tpu.memory_space<vmem>>, %arg5: memref<4x32x8xbf16, #tpu.memory_space<vmem>>, %arg6: memref<4x32x8xbf16, #tpu.memory_space<vmem>>, %arg7: memref<4x8x32xbf16, #tpu.memory_space<vmem>>, %arg8: memref<1x32xf32, #tpu.memory_space<vmem>>, %arg9: memref<1x32xf32, #tpu.memory_space<vmem>>, %arg10: memref<1x32xf32, #tpu.memory_space<vmem>>, %arg11: memref<32x128xbf16, #tpu.memory_space<vmem>>, %arg12: memref<1x128xf32, #tpu.memory_space<vmem>>, %arg13: memref<128x32xbf16, #tpu.memory_space<vmem>>, %arg14: memref<1x32xf32, #tpu.memory_space<vmem>>, %arg15: memref<1x8x32xf32, #tpu.memory_space<vmem>>) attributes {dimension_semantics = [#tpu.dimension_semantics<parallel>], iteration_bounds = array<i64: 2>, scalar_prefetch = 0 : i64, scratch_operands = 0 : i64, tpu.core_type = #tpu.core_type<tc>, window_params = [{transform_indices = @transform_0, window_bounds = array<i64: 1, 8, 32>}, {pipeline_mode = #tpu.pipeline_mode<synchronous>, transform_indices = @transform_1, window_bounds = array<i64: 1, 32>}, {pipeline_mode = #tpu.pipeline_mode<synchronous>, transform_indices = @transform_2, window_bounds = array<i64: 1, 32>}, {pipeline_mode = #tpu.pipeline_mode<synchronous>, transform_indices = @transform_3, window_bounds = array<i64: 4, 32, 8>}, {pipeline_mode = #tpu.pipeline_mode<synchronous>, transform_indices = @transform_4, window_bounds = array<i64: 4, 32, 8>}, {pipeline_mode = #tpu.pipeline_mode<synchronous>, transform_indices = @transform_5, window_bounds = array<i64: 4, 32, 8>}, {pipeline_mode = #tpu.pipeline_mode<synchronous>, transform_indices = @transform_6, window_bounds = array<i64: 4, 8, 32>}, {pipeline_mode = #tpu.pipeline_mode<synchronous>, transform_indices = @transform_7, window_bounds = array<i64: 1, 32>}, {pipeline_mode = #tpu.pipeline_mode<synchronous>, transform_indices = @transform_8, window_bounds = array<i64: 1, 32>}, {pipeline_mode = #tpu.pipeline_mode<synchronous>, transform_indices = @transform_9, window_bounds = array<i64: 1, 32>}, {pipeline_mode = #tpu.pipeline_mode<synchronous>, transform_indices = @transform_10, window_bounds = array<i64: 32, 128>}, {pipeline_mode = #tpu.pipeline_mode<synchronous>, transform_indices = @transform_11, window_bounds = array<i64: 1, 128>}, {pipeline_mode = #tpu.pipeline_mode<synchronous>, transform_indices = @transform_12, window_bounds = array<i64: 128, 32>}, {pipeline_mode = #tpu.pipeline_mode<synchronous>, transform_indices = @transform_13, window_bounds = array<i64: 1, 32>}, {transform_indices = @transform_14, window_bounds = array<i64: 1, 8, 32>}]} {
    %c0 = arith.constant 0 : index
    %c0_0 = arith.constant 0 : index
    %c0_1 = arith.constant 0 : index
    %0 = vector.load %arg1[%c0, %c0_0, %c0_1] : memref<1x8x32xf32, #tpu.memory_space<vmem>>, vector<1x8x32xf32>
    %1 = vector.shape_cast %0 : vector<1x8x32xf32> to vector<8x32xf32>
    %c0_2 = arith.constant 0 : index
    %c0_3 = arith.constant 0 : index
    %2 = vector.load %arg2[%c0_2, %c0_3] : memref<1x32xf32, #tpu.memory_space<vmem>>, vector<1x32xf32>
    %3 = vector.shape_cast %2 : vector<1x32xf32> to vector<32xf32>
    %c0_4 = arith.constant 0 : index
    %c0_5 = arith.constant 0 : index
    %4 = vector.load %arg3[%c0_4, %c0_5] : memref<1x32xf32, #tpu.memory_space<vmem>>, vector<1x32xf32>
    %5 = vector.shape_cast %4 : vector<1x32xf32> to vector<32xf32>
    %cst = arith.constant dense<0.000000e+00> : vector<8xf32>
    %6 = vector.multi_reduction <add>, %1, %cst [1] : vector<8x32xf32> to vector<8xf32>
    %7 = vector.shape_cast %6 : vector<8xf32> to vector<8x1xf32>
    %cst_6 = arith.constant 3.200000e+01 : f32
    %8 = vector.broadcast %cst_6 : f32 to vector<8x1xf32>
    %9 = arith.divf %7, %8 : vector<8x1xf32>
    %10 = vector.broadcast %9 : vector<8x1xf32> to vector<8x32xf32>
    %11 = arith.subf %1, %10 : vector<8x32xf32>
    %12 = arith.mulf %11, %11 : vector<8x32xf32>
    %cst_7 = arith.constant dense<0.000000e+00> : vector<8xf32>
    %13 = vector.multi_reduction <add>, %12, %cst_7 [1] : vector<8x32xf32> to vector<8xf32>
    %14 = vector.shape_cast %13 : vector<8xf32> to vector<8x1xf32>
    %cst_8 = arith.constant 3.200000e+01 : f32
    %15 = vector.broadcast %cst_8 : f32 to vector<8x1xf32>
    %16 = arith.divf %14, %15 : vector<8x1xf32>
    %17 = vector.broadcast %9 : vector<8x1xf32> to vector<8x32xf32>
    %18 = arith.subf %1, %17 : vector<8x32xf32>
    %cst_9 = arith.constant 9.99999974E-6 : f32
    %19 = vector.broadcast %cst_9 : f32 to vector<8x1xf32>
    %20 = arith.addf %16, %19 : vector<8x1xf32>
    %21 = math.rsqrt %20 : vector<8x1xf32>
    %22 = vector.broadcast %21 : vector<8x1xf32> to vector<8x32xf32>
    %23 = arith.mulf %18, %22 : vector<8x32xf32>
    %24 = vector.shape_cast %3 : vector<32xf32> to vector<1x32xf32>
    %25 = vector.broadcast %24 : vector<1x32xf32> to vector<8x32xf32>
    %26 = arith.mulf %23, %25 : vector<8x32xf32>
    %27 = vector.shape_cast %5 : vector<32xf32> to vector<1x32xf32>
    %28 = vector.broadcast %27 : vector<1x32xf32> to vector<8x32xf32>
    %29 = arith.addf %26, %28 : vector<8x32xf32>
    %30 = arith.truncf %29 : vector<8x32xf32> to vector<8x32xbf16>
    %31 = vector.shape_cast %30 : vector<8x32xbf16> to vector<1x8x32xbf16>
    %32 = vector.shape_cast %31 : vector<1x8x32xbf16> to vector<1x8x32xbf16>
    %33 = vector.broadcast %32 : vector<1x8x32xbf16> to vector<4x8x32xbf16>
    %c0_10 = arith.constant 0 : index
    %c0_11 = arith.constant 0 : index
    %c0_12 = arith.constant 0 : index
    %34 = vector.load %arg4[%c0_10, %c0_11, %c0_12] : memref<4x32x8xbf16, #tpu.memory_space<vmem>>, vector<4x32x8xbf16>
    "tpu.trace_start"() <{level = 10 : i32, message = "hnc,hcd->hnd"}> : () -> ()
    %cst_13 = arith.constant dense<0.000000e+00> : vector<4x8x8xf32>
    %35 = tpu.matmul %33, %34, %cst_13 {dimension_numbers = #tpu.dot_dimension_numbers<[2], [1], [1], [2], [0, 0, 0, 1, 1, 2], [0], [0]>} : vector<4x8x32xbf16>, vector<4x32x8xbf16>, vector<4x8x8xf32> -> vector<4x8x8xf32>
    "tpu.trace_stop"() : () -> ()
    %c0_14 = arith.constant 0 : index
    %c0_15 = arith.constant 0 : index
    %c0_16 = arith.constant 0 : index
    %36 = vector.load %arg5[%c0_14, %c0_15, %c0_16] : memref<4x32x8xbf16, #tpu.memory_space<vmem>>, vector<4x32x8xbf16>
    "tpu.trace_start"() <{level = 10 : i32, message = "hnc,hcd->hnd"}> : () -> ()
    %cst_17 = arith.constant dense<0.000000e+00> : vector<4x8x8xf32>
    %37 = tpu.matmul %33, %36, %cst_17 {dimension_numbers = #tpu.dot_dimension_numbers<[2], [1], [1], [2], [0, 0, 0, 1, 1, 2], [0], [0]>} : vector<4x8x32xbf16>, vector<4x32x8xbf16>, vector<4x8x8xf32> -> vector<4x8x8xf32>
    "tpu.trace_stop"() : () -> ()
    %c0_18 = arith.constant 0 : index
    %c0_19 = arith.constant 0 : index
    %c0_20 = arith.constant 0 : index
    %38 = vector.load %arg6[%c0_18, %c0_19, %c0_20] : memref<4x32x8xbf16, #tpu.memory_space<vmem>>, vector<4x32x8xbf16>
    "tpu.trace_start"() <{level = 10 : i32, message = "hnc,hcd->hnd"}> : () -> ()
    %cst_21 = arith.constant dense<0.000000e+00> : vector<4x8x8xf32>
    %39 = tpu.matmul %33, %38, %cst_21 {dimension_numbers = #tpu.dot_dimension_numbers<[2], [1], [1], [2], [0, 0, 0, 1, 1, 2], [0], [0]>} : vector<4x8x32xbf16>, vector<4x32x8xbf16>, vector<4x8x8xf32> -> vector<4x8x8xf32>
    "tpu.trace_stop"() : () -> ()
    %40 = arith.truncf %35 : vector<4x8x8xf32> to vector<4x8x8xbf16>
    %41 = arith.truncf %37 : vector<4x8x8xf32> to vector<4x8x8xbf16>
    "tpu.trace_start"() <{level = 10 : i32, message = "hqd,hkd->hqk"}> : () -> ()
    %cst_22 = arith.constant dense<0.000000e+00> : vector<4x8x8xf32>
    %42 = tpu.matmul %40, %41, %cst_22 {dimension_numbers = #tpu.dot_dimension_numbers<[2], [2], [1], [1], [0, 0, 0, 1, 1, 1], [0], [0]>} : vector<4x8x8xbf16>, vector<4x8x8xbf16>, vector<4x8x8xf32> -> vector<4x8x8xf32>
    "tpu.trace_stop"() : () -> ()
    %cst_23 = arith.constant dense<0xFF800000> : vector<4x8xf32>
    %43 = vector.multi_reduction <maximumf>, %42, %cst_23 [2] : vector<4x8x8xf32> to vector<4x8xf32>
    %44 = vector.shape_cast %43 : vector<4x8xf32> to vector<4x8x1xf32>
    %45 = vector.broadcast %44 : vector<4x8x1xf32> to vector<4x8x8xf32>
    %46 = arith.subf %42, %45 : vector<4x8x8xf32>
    %47 = math.exp %46 : vector<4x8x8xf32>
    %cst_24 = arith.constant dense<0.000000e+00> : vector<4x8xf32>
    %48 = vector.multi_reduction <add>, %47, %cst_24 [2] : vector<4x8x8xf32> to vector<4x8xf32>
    %49 = vector.shape_cast %48 : vector<4x8xf32> to vector<4x8x1xf32>
    %50 = tpu.reciprocal %49 {approx = true} : vector<4x8x1xf32> -> vector<4x8x1xf32>
    %51 = vector.broadcast %50 : vector<4x8x1xf32> to vector<4x8x8xf32>
    %52 = arith.mulf %47, %51 : vector<4x8x8xf32>
    %53 = arith.truncf %52 : vector<4x8x8xf32> to vector<4x8x8xbf16>
    %54 = arith.truncf %39 : vector<4x8x8xf32> to vector<4x8x8xbf16>
    "tpu.trace_start"() <{level = 10 : i32, message = "hqk,hkd->hqd"}> : () -> ()
    %cst_25 = arith.constant dense<0.000000e+00> : vector<4x8x8xf32>
    %55 = tpu.matmul %53, %54, %cst_25 {dimension_numbers = #tpu.dot_dimension_numbers<[2], [1], [1], [2], [0, 0, 0, 1, 1, 2], [0], [0]>} : vector<4x8x8xbf16>, vector<4x8x8xbf16>, vector<4x8x8xf32> -> vector<4x8x8xf32>
    "tpu.trace_stop"() : () -> ()
    %56 = arith.truncf %55 : vector<4x8x8xf32> to vector<4x8x8xbf16>
    %c0_26 = arith.constant 0 : index
    %c0_27 = arith.constant 0 : index
    %c0_28 = arith.constant 0 : index
    %57 = vector.load %arg7[%c0_26, %c0_27, %c0_28] : memref<4x8x32xbf16, #tpu.memory_space<vmem>>, vector<4x8x32xbf16>
    "tpu.trace_start"() <{level = 10 : i32, message = "hnd,hdc->hnc"}> : () -> ()
    %cst_29 = arith.constant dense<0.000000e+00> : vector<4x8x32xf32>
    %58 = tpu.matmul %56, %57, %cst_29 {dimension_numbers = #tpu.dot_dimension_numbers<[2], [1], [1], [2], [0, 0, 0, 1, 1, 2], [0], [0]>} : vector<4x8x8xbf16>, vector<4x8x32xbf16>, vector<4x8x32xf32> -> vector<4x8x32xf32>
    "tpu.trace_stop"() : () -> ()
    %cst_30 = arith.constant dense<0.000000e+00> : vector<8x32xf32>
    %59 = vector.multi_reduction <add>, %58, %cst_30 [0] : vector<4x8x32xf32> to vector<8x32xf32>
    %c0_31 = arith.constant 0 : index
    %c0_32 = arith.constant 0 : index
    %60 = vector.load %arg8[%c0_31, %c0_32] : memref<1x32xf32, #tpu.memory_space<vmem>>, vector<1x32xf32>
    %61 = vector.shape_cast %60 : vector<1x32xf32> to vector<32xf32>
    %62 = vector.shape_cast %61 : vector<32xf32> to vector<1x32xf32>
    %63 = vector.broadcast %62 : vector<1x32xf32> to vector<8x32xf32>
    %64 = arith.addf %59, %63 : vector<8x32xf32>
    %65 = arith.addf %1, %64 : vector<8x32xf32>
    %c0_33 = arith.constant 0 : index
    %c0_34 = arith.constant 0 : index
    %66 = vector.load %arg9[%c0_33, %c0_34] : memref<1x32xf32, #tpu.memory_space<vmem>>, vector<1x32xf32>
    %67 = vector.shape_cast %66 : vector<1x32xf32> to vector<32xf32>
    %c0_35 = arith.constant 0 : index
    %c0_36 = arith.constant 0 : index
    %68 = vector.load %arg10[%c0_35, %c0_36] : memref<1x32xf32, #tpu.memory_space<vmem>>, vector<1x32xf32>
    %69 = vector.shape_cast %68 : vector<1x32xf32> to vector<32xf32>
    %cst_37 = arith.constant dense<0.000000e+00> : vector<8xf32>
    %70 = vector.multi_reduction <add>, %65, %cst_37 [1] : vector<8x32xf32> to vector<8xf32>
    %71 = vector.shape_cast %70 : vector<8xf32> to vector<8x1xf32>
    %cst_38 = arith.constant 3.200000e+01 : f32
    %72 = vector.broadcast %cst_38 : f32 to vector<8x1xf32>
    %73 = arith.divf %71, %72 : vector<8x1xf32>
    %74 = vector.broadcast %73 : vector<8x1xf32> to vector<8x32xf32>
    %75 = arith.subf %65, %74 : vector<8x32xf32>
    %76 = arith.mulf %75, %75 : vector<8x32xf32>
    %cst_39 = arith.constant dense<0.000000e+00> : vector<8xf32>
    %77 = vector.multi_reduction <add>, %76, %cst_39 [1] : vector<8x32xf32> to vector<8xf32>
    %78 = vector.shape_cast %77 : vector<8xf32> to vector<8x1xf32>
    %cst_40 = arith.constant 3.200000e+01 : f32
    %79 = vector.broadcast %cst_40 : f32 to vector<8x1xf32>
    %80 = arith.divf %78, %79 : vector<8x1xf32>
    %81 = vector.broadcast %73 : vector<8x1xf32> to vector<8x32xf32>
    %82 = arith.subf %65, %81 : vector<8x32xf32>
    %cst_41 = arith.constant 9.99999974E-6 : f32
    %83 = vector.broadcast %cst_41 : f32 to vector<8x1xf32>
    %84 = arith.addf %80, %83 : vector<8x1xf32>
    %85 = math.rsqrt %84 : vector<8x1xf32>
    %86 = vector.broadcast %85 : vector<8x1xf32> to vector<8x32xf32>
    %87 = arith.mulf %82, %86 : vector<8x32xf32>
    %88 = vector.shape_cast %67 : vector<32xf32> to vector<1x32xf32>
    %89 = vector.broadcast %88 : vector<1x32xf32> to vector<8x32xf32>
    %90 = arith.mulf %87, %89 : vector<8x32xf32>
    %91 = vector.shape_cast %69 : vector<32xf32> to vector<1x32xf32>
    %92 = vector.broadcast %91 : vector<1x32xf32> to vector<8x32xf32>
    %93 = arith.addf %90, %92 : vector<8x32xf32>
    %94 = arith.truncf %93 : vector<8x32xf32> to vector<8x32xbf16>
    %c0_42 = arith.constant 0 : index
    %c0_43 = arith.constant 0 : index
    %95 = vector.load %arg11[%c0_42, %c0_43] : memref<32x128xbf16, #tpu.memory_space<vmem>>, vector<32x128xbf16>
    %cst_44 = arith.constant dense<0.000000e+00> : vector<8x128xf32>
    %96 = tpu.matmul %94, %95, %cst_44 {dimension_numbers = #tpu.dot_dimension_numbers<[1], [0], [0], [1], [0, 0, 1, 1], [], []>} : vector<8x32xbf16>, vector<32x128xbf16>, vector<8x128xf32> -> vector<8x128xf32>
    %c0_45 = arith.constant 0 : index
    %c0_46 = arith.constant 0 : index
    %97 = vector.load %arg12[%c0_45, %c0_46] : memref<1x128xf32, #tpu.memory_space<vmem>>, vector<1x128xf32>
    %98 = vector.shape_cast %97 : vector<1x128xf32> to vector<128xf32>
    %99 = vector.shape_cast %98 : vector<128xf32> to vector<1x128xf32>
    %100 = vector.broadcast %99 : vector<1x128xf32> to vector<8x128xf32>
    %101 = arith.addf %96, %100 : vector<8x128xf32>
    %cst_47 = arith.constant 5.000000e-01 : f32
    %102 = vector.broadcast %cst_47 : f32 to vector<8x128xf32>
    %103 = arith.mulf %102, %101 : vector<8x128xf32>
    %cst_48 = arith.constant 0.707106769 : f32
    %104 = vector.broadcast %cst_48 : f32 to vector<8x128xf32>
    %105 = arith.mulf %101, %104 : vector<8x128xf32>
    %106 = math.erf %105 : vector<8x128xf32>
    %cst_49 = arith.constant 1.000000e+00 : f32
    %107 = vector.broadcast %cst_49 : f32 to vector<8x128xf32>
    %108 = arith.addf %107, %106 : vector<8x128xf32>
    %109 = arith.mulf %103, %108 : vector<8x128xf32>
    %110 = arith.truncf %109 : vector<8x128xf32> to vector<8x128xbf16>
    %c0_50 = arith.constant 0 : index
    %c0_51 = arith.constant 0 : index
    %111 = vector.load %arg13[%c0_50, %c0_51] : memref<128x32xbf16, #tpu.memory_space<vmem>>, vector<128x32xbf16>
    %cst_52 = arith.constant dense<0.000000e+00> : vector<8x32xf32>
    %112 = tpu.matmul %110, %111, %cst_52 {dimension_numbers = #tpu.dot_dimension_numbers<[1], [0], [0], [1], [0, 0, 1, 1], [], []>} : vector<8x128xbf16>, vector<128x32xbf16>, vector<8x32xf32> -> vector<8x32xf32>
    %c0_53 = arith.constant 0 : index
    %c0_54 = arith.constant 0 : index
    %113 = vector.load %arg14[%c0_53, %c0_54] : memref<1x32xf32, #tpu.memory_space<vmem>>, vector<1x32xf32>
    %114 = vector.shape_cast %113 : vector<1x32xf32> to vector<32xf32>
    %115 = vector.shape_cast %114 : vector<32xf32> to vector<1x32xf32>
    %116 = vector.broadcast %115 : vector<1x32xf32> to vector<8x32xf32>
    %117 = arith.addf %112, %116 : vector<8x32xf32>
    %118 = arith.addf %65, %117 : vector<8x32xf32>
    %c0_55 = arith.constant 0 : index
    %c0_56 = arith.constant 0 : index
    %c0_57 = arith.constant 0 : index
    %119 = vector.load %arg15[%c0_55, %c0_56, %c0_57] : memref<1x8x32xf32, #tpu.memory_space<vmem>>, vector<1x8x32xf32>
    %120 = vector.shape_cast %119 : vector<1x8x32xf32> to vector<8x32xf32>
    %121 = vector.shape_cast %118 : vector<8x32xf32> to vector<1x8x32xf32>
    tpu.vector_store %arg15[%c0_55, %c0_56, %c0_57], %121 {strides = array<i32>} : memref<1x8x32xf32, #tpu.memory_space<vmem>>, vector<1x8x32xf32>,
    return
  }
  func.func @transform_0(%arg0: i32) -> (i32, i32, i32) {
    %c0_i32 = arith.constant 0 : i32
    %c0_i32_0 = arith.constant 0 : i32
    %c0_i32_1 = arith.constant 0 : i32
    return %arg0, %c0_i32, %c0_i32_0 : i32, i32, i32
  }
  func.func @transform_1(%arg0: i32) -> (i32, i32) {
    %c0_i32 = arith.constant 0 : i32
    %c0_i32_0 = arith.constant 0 : i32
    %c0_i32_1 = arith.constant 0 : i32
    return %c0_i32, %c0_i32_0 : i32, i32
  }
  func.func @transform_2(%arg0: i32) -> (i32, i32) {
    %c0_i32 = arith.constant 0 : i32
    %c0_i32_0 = arith.constant 0 : i32
    %c0_i32_1 = arith.constant 0 : i32
    return %c0_i32, %c0_i32_0 : i32, i32
  }
  func.func @transform_3(%arg0: i32) -> (i32, i32, i32) {
    %c0_i32 = arith.constant 0 : i32
    %c0_i32_0 = arith.constant 0 : i32
    %c0_i32_1 = arith.constant 0 : i32
    %c0_i32_2 = arith.constant 0 : i32
    return %c0_i32, %c0_i32_0, %c0_i32_1 : i32, i32, i32
  }
  func.func @transform_4(%arg0: i32) -> (i32, i32, i32) {
    %c0_i32 = arith.constant 0 : i32
    %c0_i32_0 = arith.constant 0 : i32
    %c0_i32_1 = arith.constant 0 : i32
    %c0_i32_2 = arith.constant 0 : i32
    return %c0_i32, %c0_i32_0, %c0_i32_1 : i32, i32, i32
  }
  func.func @transform_5(%arg0: i32) -> (i32, i32, i32) {
    %c0_i32 = arith.constant 0 : i32
    %c0_i32_0 = arith.constant 0 : i32
    %c0_i32_1 = arith.constant 0 : i32
    %c0_i32_2 = arith.constant 0 : i32
    return %c0_i32, %c0_i32_0, %c0_i32_1 : i32, i32, i32
  }
  func.func @transform_6(%arg0: i32) -> (i32, i32, i32) {
    %c0_i32 = arith.constant 0 : i32
    %c0_i32_0 = arith.constant 0 : i32
    %c0_i32_1 = arith.constant 0 : i32
    %c0_i32_2 = arith.constant 0 : i32
    return %c0_i32, %c0_i32_0, %c0_i32_1 : i32, i32, i32
  }
  func.func @transform_7(%arg0: i32) -> (i32, i32) {
    %c0_i32 = arith.constant 0 : i32
    %c0_i32_0 = arith.constant 0 : i32
    %c0_i32_1 = arith.constant 0 : i32
    return %c0_i32, %c0_i32_0 : i32, i32
  }
  func.func @transform_8(%arg0: i32) -> (i32, i32) {
    %c0_i32 = arith.constant 0 : i32
    %c0_i32_0 = arith.constant 0 : i32
    %c0_i32_1 = arith.constant 0 : i32
    return %c0_i32, %c0_i32_0 : i32, i32
  }
  func.func @transform_9(%arg0: i32) -> (i32, i32) {
    %c0_i32 = arith.constant 0 : i32
    %c0_i32_0 = arith.constant 0 : i32
    %c0_i32_1 = arith.constant 0 : i32
    return %c0_i32, %c0_i32_0 : i32, i32
  }
  func.func @transform_10(%arg0: i32) -> (i32, i32) {
    %c0_i32 = arith.constant 0 : i32
    %c0_i32_0 = arith.constant 0 : i32
    %c0_i32_1 = arith.constant 0 : i32
    return %c0_i32, %c0_i32_0 : i32, i32
  }
  func.func @transform_11(%arg0: i32) -> (i32, i32) {
    %c0_i32 = arith.constant 0 : i32
    %c0_i32_0 = arith.constant 0 : i32
    %c0_i32_1 = arith.constant 0 : i32
    return %c0_i32, %c0_i32_0 : i32, i32
  }
  func.func @transform_12(%arg0: i32) -> (i32, i32) {
    %c0_i32 = arith.constant 0 : i32
    %c0_i32_0 = arith.constant 0 : i32
    %c0_i32_1 = arith.constant 0 : i32
    return %c0_i32, %c0_i32_0 : i32, i32
  }
  func.func @transform_13(%arg0: i32) -> (i32, i32) {
    %c0_i32 = arith.constant 0 : i32
    %c0_i32_0 = arith.constant 0 : i32
    %c0_i32_1 = arith.constant 0 : i32
    return %c0_i32, %c0_i32_0 : i32, i32
  }
  func.func @transform_14(%arg0: i32) -> (i32, i32, i32) {
    %c0_i32 = arith.constant 0 : i32
    %c0_i32_0 = arith.constant 0 : i32
    %c0_i32_1 = arith.constant 0 : i32
    return %arg0, %c0_i32, %c0_i32_0 : i32, i32, i32
  }
}

</mosaic_0001>

<llo_original>
// kernel: tpu_custom_call.1
$region0: #{tpu_custom_call.1}
  #allocation0 [shape = 'u32[]', space=smem, size = 0x4, offset = 0x4, fixed_abs, tag = 'smem constant byte address 0x4 - core index']
  #allocation1 [shape = 'u32[144,128]{1,0:T(1,128)}', space=vmem, size = 0x12000, scoped, tag = 'internal scratch']
  %s0 = inlined_call_operand.vmem [shape: f32[2,8,32], index: 0, kind: input, shape index: {}]
  %s1 = inlined_call_operand.vmem [shape: f32[1,32], index: 1, kind: input, shape index: {}]
  %s2 = inlined_call_operand.vmem [shape: f32[1,32], index: 2, kind: input, shape index: {}]
  %s3 = inlined_call_operand.vmem [shape: bf16[4,32,8], index: 3, kind: input, shape index: {}]
  %s4 = inlined_call_operand.vmem [shape: bf16[4,32,8], index: 4, kind: input, shape index: {}]
  %s5 = inlined_call_operand.vmem [shape: bf16[4,32,8], index: 5, kind: input, shape index: {}]
  %s6 = inlined_call_operand.vmem [shape: bf16[4,8,32], index: 6, kind: input, shape index: {}]
  %s7 = inlined_call_operand.vmem [shape: f32[1,32], index: 7, kind: input, shape index: {}]
  %s8 = inlined_call_operand.vmem [shape: f32[1,32], index: 8, kind: input, shape index: {}]
  %s9 = inlined_call_operand.vmem [shape: f32[1,32], index: 9, kind: input, shape index: {}]
  %s10 = inlined_call_operand.vmem [shape: bf16[32,128], index: 10, kind: input, shape index: {}]
  %s11 = inlined_call_operand.vmem [shape: f32[1,128], index: 11, kind: input, shape index: {}]
  %s12 = inlined_call_operand.vmem [shape: bf16[128,32], index: 12, kind: input, shape index: {}]
  %s13 = inlined_call_operand.vmem [shape: f32[1,32], index: 13, kind: input, shape index: {}]
  %s14 = inlined_call_operand.hbm [shape: f32[2,8,32], index: 14, kind: output, shape index: {}]
  %s15 = sld [smem:[#allocation0]]
  $region89: #{tpu_custom_call.1} parent=0
    _
  %s17 = ssub.s32 1, %s15
  %s18 = scalar_select 0, %s17, %s15
  $region1: #{tpu_custom_call.1} parent=0
    #allocation2 [shape = 'u8[8192]{0}', space=vmem, size = 0x2000, scoped, tag = 'output window, operand 0']
    #allocation3 [shape = 's32[2]{0}', space=sflag, size = 0x8, scoped, tag = 'scoped memory for tpu_custom_call.1']
    %19 = vsyncpa [#allocation3], 0
    %s20 = scalar_lea.sflag [#allocation3], 1
    %21 = vsyncpa %s20, 0
    loop: start=0, step=1, limit=4
    $region2: #{tpu_custom_call.1} parent=1 // loop_pre_header
      _
    $region3: #{tpu_custom_call.1} parent=1 // loop_header
      %s23 = sphi 0, %s27
      %p24 = scmp.ge.s32.totalorder %s23, 4
      %s33 = sphi 0, %s35
      %s36 = sphi 0, %s33
      %s37 = sphi 0, %s36
      %s53 = sphi 0, %s37
      %s57 = sphi 0, %s57
      %s59 = sphi 0, %s57
      %s60 = sphi 0, %s59
      %s74 = sphi 0, %s60
      %s78 = sphi 0, %s78
      %s80 = sphi 0, %s78
      %s81 = sphi 0, %s80
      %s95 = sphi 0, %s81
      %s99 = sphi 0, %s99
      %s101 = sphi 0, %s99
      %s102 = sphi 0, %s101
      %s116 = sphi 0, %s102
      %s120 = sphi 0, %s120
      %s122 = sphi 0, %s120
      %s123 = sphi 0, %s122
      %s137 = sphi 0, %s123
      %s141 = sphi 0, %s141
      %s143 = sphi 0, %s141
      %s144 = sphi 0, %s143
      %s158 = sphi 0, %s144
      %s162 = sphi 0, %s162
      %s164 = sphi 0, %s162
      %s165 = sphi 0, %s164
      %s179 = sphi 0, %s165
      %s183 = sphi 0, %s183
      %s185 = sphi 0, %s183
      %s186 = sphi 0, %s185
      %s200 = sphi 0, %s186
      %s204 = sphi 0, %s204
      %s206 = sphi 0, %s204
      %s207 = sphi 0, %s206
      %s221 = sphi 0, %s207
      %s225 = sphi 0, %s225
      %s227 = sphi 0, %s225
      %s228 = sphi 0, %s227
      %s242 = sphi 0, %s228
      %s246 = sphi 0, %s246
      %s248 = sphi 0, %s246
      %s249 = sphi 0, %s248
      %s263 = sphi 0, %s249
      %s267 = sphi 0, %s267
      %s269 = sphi 0, %s267
      %s270 = sphi 0, %s269
      %s284 = sphi 0, %s270
      %s288 = sphi 0, %s288
      %s290 = sphi 0, %s288
      %s291 = sphi 0, %s290
      %s305 = sphi 0, %s291
      %s309 = sphi 0, %s309
      %s311 = sphi 0, %s309
      %s312 = sphi 0, %s311
      %s326 = sphi 0, %s312
      %s332 = sphi 0, %s334
      %s335 = sphi 0, %s332
      %s336 = sphi 0, %s335
      %s352 = sphi 0, %s336
    $region4: #{tpu_custom_call.1} parent=1 // loop_header_branch
      %26 = sbr.rel (%p24) target = $region8
    $region5: #{tpu_custom_call.1} parent=1 // loop_body
      %s28 = ssub.s32 %s23, 1
      %s29 = ssub.s32 %s23, 2
      %s30 = sadd.s32 %s23, 1
      %s31 = ssub.s32 %s23, %s30
      %p32 = scmp.eq.s32.totalorder %s31, 0
      %s34 = sadd.s32 %s33, 1
      %s35 = scalar_select %p32, %s33, %s34
      %p38 = pneg %p32
      %p39 = scmp.eq.s32.totalorder %s23, 1
      %p40 = por %p38, %p39
      %p41 = scmp.ne.s32.totalorder %s33, %s36
      %p42 = scmp.eq.s32.totalorder %s23, 0
      %p43 = por %p41, %p42
      %p44 = scmp.ne.s32.totalorder %s33, %s36
      %p45 = scmp.eq.s32.totalorder %s28, 1
      %p46 = por %p44, %p45
      %p47 = scmp.ne.s32.totalorder %s36, %s37
      %p48 = scmp.eq.s32.totalorder %s28, 0
      %p49 = por %p47, %p48
      %p50 = scmp.ne.s32.totalorder %s36, %s37
      %p51 = scmp.eq.s32.totalorder %s29, 1
      %p52 = por %p50, %p51
      %p54 = scmp.ne.s32.totalorder %s37, %s53
      %p55 = scmp.eq.s32.totalorder %s29, 0
      %p56 = por %p54, %p55
      %s58 = sadd.s32 %s57, 1
      %p61 = scmp.eq.s32.totalorder %s23, 1
      %p62 = scmp.ne.s32.totalorder %s57, %s59
      %p63 = scmp.eq.s32.totalorder %s23, 0
      %p64 = por %p62, %p63
      %p65 = scmp.ne.s32.totalorder %s57, %s59
      %p66 = scmp.eq.s32.totalorder %s28, 1
      %p67 = por %p65, %p66
      %p68 = scmp.ne.s32.totalorder %s59, %s60
      %p69 = scmp.eq.s32.totalorder %s28, 0
      %p70 = por %p68, %p69
      %p71 = scmp.ne.s32.totalorder %s59, %s60
      %p72 = scmp.eq.s32.totalorder %s29, 1
      %p73 = por %p71, %p72
      %p75 = scmp.ne.s32.totalorder %s60, %s74
      %p76 = scmp.eq.s32.totalorder %s29, 0
      %p77 = por %p75, %p76
      %s79 = sadd.s32 %s78, 1
      %p82 = scmp.eq.s32.totalorder %s23, 1
      %p83 = scmp.ne.s32.totalorder %s78, %s80
      %p84 = scmp.eq.s32.totalorder %s23, 0
      %p85 = por %p83, %p84
      %p86 = scmp.ne.s32.totalorder %s78, %s80
      %p87 = scmp.eq.s32.totalorder %s28, 1
      %p88 = por %p86, %p87
      %p89 = scmp.ne.s32.totalorder %s80, %s81
      %p90 = scmp.eq.s32.totalorder %s28, 0
      %p91 = por %p89, %p90
      %p92 = scmp.ne.s32.totalorder %s80, %s81
      %p93 = scmp.eq.s32.totalorder %s29, 1
      %p94 = por %p92, %p93
      %p96 = scmp.ne.s32.totalorder %s81, %s95
      %p97 = scmp.eq.s32.totalorder %s29, 0
      %p98 = por %p96, %p97
      %s100 = sadd.s32 %s99, 1
      %p103 = scmp.eq.s32.totalorder %s23, 1
      %p104 = scmp.ne.s32.totalorder %s99, %s101
      %p105 = scmp.eq.s32.totalorder %s23, 0
      %p106 = por %p104, %p105
      %p107 = scmp.ne.s32.totalorder %s99, %s101
      %p108 = scmp.eq.s32.totalorder %s28, 1
      %p109 = por %p107, %p108
      %p110 = scmp.ne.s32.totalorder %s101, %s102
      %p111 = scmp.eq.s32.totalorder %s28, 0
      %p112 = por %p110, %p111
      %p113 = scmp.ne.s32.totalorder %s101, %s102
      %p114 = scmp.eq.s32.totalorder %s29, 1
      %p115 = por %p113, %p114
      %p117 = scmp.ne.s32.totalorder %s102, %s116
      %p118 = scmp.eq.s32.totalorder %s29, 0
      %p119 = por %p117, %p118
      %s121 = sadd.s32 %s120, 1
      %p124 = scmp.eq.s32.totalorder %s23, 1
      %p125 = scmp.ne.s32.totalorder %s120, %s122
      %p126 = scmp.eq.s32.totalorder %s23, 0
      %p127 = por %p125, %p126
      %p128 = scmp.ne.s32.totalorder %s120, %s122
      %p129 = scmp.eq.s32.totalorder %s28, 1
      %p130 = por %p128, %p129
      %p131 = scmp.ne.s32.totalorder %s122, %s123
      %p132 = scmp.eq.s32.totalorder %s28, 0
      %p133 = por %p131, %p132
      %p134 = scmp.ne.s32.totalorder %s122, %s123
      %p135 = scmp.eq.s32.totalorder %s29, 1
      %p136 = por %p134, %p135
      %p138 = scmp.ne.s32.totalorder %s123, %s137
      %p139 = scmp.eq.s32.totalorder %s29, 0
      %p140 = por %p138, %p139
      %s142 = sadd.s32 %s141, 1
      %p145 = scmp.eq.s32.totalorder %s23, 1
      %p146 = scmp.ne.s32.totalorder %s141, %s143
      %p147 = scmp.eq.s32.totalorder %s23, 0
      %p148 = por %p146, %p147
      %p149 = scmp.ne.s32.totalorder %s141, %s143
      %p150 = scmp.eq.s32.totalorder %s28, 1
      %p151 = por %p149, %p150
      %p152 = scmp.ne.s32.totalorder %s143, %s144
      %p153 = scmp.eq.s32.totalorder %s28, 0
      %p154 = por %p152, %p153
      %p155 = scmp.ne.s32.totalorder %s143, %s144
      %p156 = scmp.eq.s32.totalorder %s29, 1
      %p157 = por %p155, %p156
      %p159 = scmp.ne.s32.totalorder %s144, %s158
      %p160 = scmp.eq.s32.totalorder %s29, 0
      %p161 = por %p159, %p160
      %s163 = sadd.s32 %s162, 1
      %p166 = scmp.eq.s32.totalorder %s23, 1
      %p167 = scmp.ne.s32.totalorder %s162, %s164
      %p168 = scmp.eq.s32.totalorder %s23, 0
      %p169 = por %p167, %p168
      %p170 = scmp.ne.s32.totalorder %s162, %s164
      %p171 = scmp.eq.s32.totalorder %s28, 1
      %p172 = por %p170, %p171
      %p173 = scmp.ne.s32.totalorder %s164, %s165
      %p174 = scmp.eq.s32.totalorder %s28, 0
      %p175 = por %p173, %p174
      %p176 = scmp.ne.s32.totalorder %s164, %s165
      %p177 = scmp.eq.s32.totalorder %s29, 1
      %p178 = por %p176, %p177
      %p180 = scmp.ne.s32.totalorder %s165, %s179
      %p181 = scmp.eq.s32.totalorder %s29, 0
      %p182 = por %p180, %p181
      %s184 = sadd.s32 %s183, 1
      %p187 = scmp.eq.s32.totalorder %s23, 1
      %p188 = scmp.ne.s32.totalorder %s183, %s185
      %p189 = scmp.eq.s32.totalorder %s23, 0
      %p190 = por %p188, %p189
      %p191 = scmp.ne.s32.totalorder %s183, %s185
      %p192 = scmp.eq.s32.totalorder %s28, 1
      %p193 = por %p191, %p192
      %p194 = scmp.ne.s32.totalorder %s185, %s186
      %p195 = scmp.eq.s32.totalorder %s28, 0
      %p196 = por %p194, %p195
      %p197 = scmp.ne.s32.totalorder %s185, %s186
      %p198 = scmp.eq.s32.totalorder %s29, 1
      %p199 = por %p197, %p198
      %p201 = scmp.ne.s32.totalorder %s186, %s200
      %p202 = scmp.eq.s32.totalorder %s29, 0
      %p203 = por %p201, %p202
      %s205 = sadd.s32 %s204, 1
      %p208 = scmp.eq.s32.totalorder %s23, 1
      %p209 = scmp.ne.s32.totalorder %s204, %s206
      %p210 = scmp.eq.s32.totalorder %s23, 0
      %p211 = por %p209, %p210
      %p212 = scmp.ne.s32.totalorder %s204, %s206
      %p213 = scmp.eq.s32.totalorder %s28, 1
      %p214 = por %p212, %p213
      %p215 = scmp.ne.s32.totalorder %s206, %s207
      %p216 = scmp.eq.s32.totalorder %s28, 0
      %p217 = por %p215, %p216
      %p218 = scmp.ne.s32.totalorder %s206, %s207
      %p219 = scmp.eq.s32.totalorder %s29, 1
      %p220 = por %p218, %p219
      %p222 = scmp.ne.s32.totalorder %s207, %s221
      %p223 = scmp.eq.s32.totalorder %s29, 0
      %p224 = por %p222, %p223
      %s226 = sadd.s32 %s225, 1
      %p229 = scmp.eq.s32.totalorder %s23, 1
      %p230 = scmp.ne.s32.totalorder %s225, %s227
      %p231 = scmp.eq.s32.totalorder %s23, 0
      %p232 = por %p230, %p231
      %p233 = scmp.ne.s32.totalorder %s225, %s227
      %p234 = scmp.eq.s32.totalorder %s28, 1
      %p235 = por %p233, %p234
      %p236 = scmp.ne.s32.totalorder %s227, %s228
      %p237 = scmp.eq.s32.totalorder %s28, 0
      %p238 = por %p236, %p237
      %p239 = scmp.ne.s32.totalorder %s227, %s228
      %p240 = scmp.eq.s32.totalorder %s29, 1
      %p241 = por %p239, %p240
      %p243 = scmp.ne.s32.totalorder %s228, %s242
      %p244 = scmp.eq.s32.totalorder %s29, 0
      %p245 = por %p243, %p244
      %s247 = sadd.s32 %s246, 1
      %p250 = scmp.eq.s32.totalorder %s23, 1
      %p251 = scmp.ne.s32.totalorder %s246, %s248
      %p252 = scmp.eq.s32.totalorder %s23, 0
      %p253 = por %p251, %p252
      %p254 = scmp.ne.s32.totalorder %s246, %s248
      %p255 = scmp.eq.s32.totalorder %s28, 1
      %p256 = por %p254, %p255
      %p257 = scmp.ne.s32.totalorder %s248, %s249
      %p258 = scmp.eq.s32.totalorder %s28, 0
      %p259 = por %p257, %p258
      %p260 = scmp.ne.s32.totalorder %s248, %s249
      %p261 = scmp.eq.s32.totalorder %s29, 1
      %p262 = por %p260, %p261
      %p264 = scmp.ne.s32.totalorder %s249, %s263
      %p265 = scmp.eq.s32.totalorder %s29, 0
      %p266 = por %p264, %p265
      %s268 = sadd.s32 %s267, 1
      %p271 = scmp.eq.s32.totalorder %s23, 1
      %p272 = scmp.ne.s32.totalorder %s267, %s269
      %p273 = scmp.eq.s32.totalorder %s23, 0
      %p274 = por %p272, %p273
      %p275 = scmp.ne.s32.totalorder %s267, %s269
      %p276 = scmp.eq.s32.totalorder %s28, 1
      %p277 = por %p275, %p276
      %p278 = scmp.ne.s32.totalorder %s269, %s270
      %p279 = scmp.eq.s32.totalorder %s28, 0
      %p280 = por %p278, %p279
      %p281 = scmp.ne.s32.totalorder %s269, %s270
      %p282 = scmp.eq.s32.totalorder %s29, 1
      %p283 = por %p281, %p282
      %p285 = scmp.ne.s32.totalorder %s270, %s284
      %p286 = scmp.eq.s32.totalorder %s29, 0
      %p287 = por %p285, %p286
      %s289 = sadd.s32 %s288, 1
      %p292 = scmp.eq.s32.totalorder %s23, 1
      %p293 = scmp.ne.s32.totalorder %s288, %s290
      %p294 = scmp.eq.s32.totalorder %s23, 0
      %p295 = por %p293, %p294
      %p296 = scmp.ne.s32.totalorder %s288, %s290
      %p297 = scmp.eq.s32.totalorder %s28, 1
      %p298 = por %p296, %p297
      %p299 = scmp.ne.s32.totalorder %s290, %s291
      %p300 = scmp.eq.s32.totalorder %s28, 0
      %p301 = por %p299, %p300
      %p302 = scmp.ne.s32.totalorder %s290, %s291
      %p303 = scmp.eq.s32.totalorder %s29, 1
      %p304 = por %p302, %p303
      %p306 = scmp.ne.s32.totalorder %s291, %s305
      %p307 = scmp.eq.s32.totalorder %s29, 0
      %p308 = por %p306, %p307
      %s310 = sadd.s32 %s309, 1
      %p313 = scmp.eq.s32.totalorder %s23, 1
      %p314 = scmp.ne.s32.totalorder %s309, %s311
      %p315 = scmp.eq.s32.totalorder %s23, 0
      %p316 = por %p314, %p315
      %p317 = scmp.ne.s32.totalorder %s309, %s311
      %p318 = scmp.eq.s32.totalorder %s28, 1
      %p319 = por %p317, %p318
      %p320 = scmp.ne.s32.totalorder %s311, %s312
      %p321 = scmp.eq.s32.totalorder %s28, 0
      %p322 = por %p320, %p321
      %p323 = scmp.ne.s32.totalorder %s311, %s312
      %p324 = scmp.eq.s32.totalorder %s29, 1
      %p325 = por %p323, %p324
      %p327 = scmp.ne.s32.totalorder %s312, %s326
      %p328 = scmp.eq.s32.totalorder %s29, 0
      %p329 = por %p327, %p328
      %s330 = ssub.s32 %s23, %s30
      %p331 = scmp.eq.s32.totalorder %s330, 0
      %s333 = sadd.s32 %s332, 1
      %s334 = scalar_select %p331, %s332, %s333
      %p337 = pneg %p331
      %p338 = scmp.eq.s32.totalorder %s23, 1
      %p339 = por %p337, %p338
      %p340 = scmp.ne.s32.totalorder %s332, %s335
      %p341 = scmp.eq.s32.totalorder %s23, 0
      %p342 = por %p340, %p341
      %p343 = scmp.ne.s32.totalorder %s332, %s335
      %p344 = scmp.eq.s32.totalorder %s28, 1
      %p345 = por %p343, %p344
      %p346 = scmp.ne.s32.totalorder %s335, %s336
      %p347 = scmp.eq.s32.totalorder %s28, 0
      %p348 = por %p346, %p347
      %p349 = scmp.ne.s32.totalorder %s335, %s336
      %p350 = scmp.eq.s32.totalorder %s29, 1
      %p351 = por %p349, %p350
      %p353 = scmp.ne.s32.totalorder %s336, %s352
      %p354 = scmp.eq.s32.totalorder %s29, 0
      %p355 = por %p353, %p354
      %p356 = scmp.le.s32.totalorder 1, %s23
      %p357 = scmp.lt.s32.totalorder %s23, 3
      %p358 = pnand %p356, %p357
      %p359 = pneg %p358
      // Predicated region
      $region9: #{tpu_custom_call.1} parent=5 // pred_check
        _
      $region10: #{tpu_custom_call.1} parent=5 // pred_check_branch
        %361 = sbr.rel (%p358) target = $region12
      $region11: #{tpu_custom_call.1} parent=5 // pred_region
        %s362 = ssub.s32 %s23, 1
        // Predicated region
        $region13: #{tpu_custom_call.1} parent=11 // pred_check
          %p363 = pneg %p70
        $region14: #{tpu_custom_call.1} parent=11 // pred_check_branch
          %365 = sbr.rel (%p363) target = $region16
        $region15: #{tpu_custom_call.1} parent=11 // pred_region
          _
        $region16: #{tpu_custom_call.1} parent=11 // pred_fallthru
          _
        // Predicated region
        $region17: #{tpu_custom_call.1} parent=11 // pred_check
          %p366 = pneg %p91
        $region18: #{tpu_custom_call.1} parent=11 // pred_check_branch
          %368 = sbr.rel (%p366) target = $region20
        $region19: #{tpu_custom_call.1} parent=11 // pred_region
          _
        $region20: #{tpu_custom_call.1} parent=11 // pred_fallthru
          _
        // Predicated region
        $region21: #{tpu_custom_call.1} parent=11 // pred_check
          %p369 = pneg %p112
        $region22: #{tpu_custom_call.1} parent=11 // pred_check_branch
          %371 = sbr.rel (%p369) target = $region24
        $region23: #{tpu_custom_call.1} parent=11 // pred_region
          _
        $region24: #{tpu_custom_call.1} parent=11 // pred_fallthru
          _
        // Predicated region
        $region25: #{tpu_custom_call.1} parent=11 // pred_check
          %p372 = pneg %p133
        $region26: #{tpu_custom_call.1} parent=11 // pred_check_branch
          %374 = sbr.rel (%p372) target = $region28
        $region27: #{tpu_custom_call.1} parent=11 // pred_region
          _
        $region28: #{tpu_custom_call.1} parent=11 // pred_fallthru
          _
        // Predicated region
        $region29: #{tpu_custom_call.1} parent=11 // pred_check
          %p375 = pneg %p154
        $region30: #{tpu_custom_call.1} parent=11 // pred_check_branch
          %377 = sbr.rel (%p375) target = $region32
        $region31: #{tpu_custom_call.1} parent=11 // pred_region
          _
        $region32: #{tpu_custom_call.1} parent=11 // pred_fallthru
          _
        // Predicated region
        $region33: #{tpu_custom_call.1} parent=11 // pred_check
          %p378 = pneg %p175
        $region34: #{tpu_custom_call.1} parent=11 // pred_check_branch
          %380 = sbr.rel (%p378) target = $region36
        $region35: #{tpu_custom_call.1} parent=11 // pred_region
          _
        $region36: #{tpu_custom_call.1} parent=11 // pred_fallthru
          _
        // Predicated region
        $region37: #{tpu_custom_call.1} parent=11 // pred_check
          %p381 = pneg %p196
        $region38: #{tpu_custom_call.1} parent=11 // pred_check_branch
          %383 = sbr.rel (%p381) target = $region40
        $region39: #{tpu_custom_call.1} parent=11 // pred_region
          _
        $region40: #{tpu_custom_call.1} parent=11 // pred_fallthru
          _
        // Predicated region
        $region41: #{tpu_custom_call.1} parent=11 // pred_check
          %p384 = pneg %p217
        $region42: #{tpu_custom_call.1} parent=11 // pred_check_branch
          %386 = sbr.rel (%p384) target = $region44
        $region43: #{tpu_custom_call.1} parent=11 // pred_region
          _
        $region44: #{tpu_custom_call.1} parent=11 // pred_fallthru
          _
        // Predicated region
        $region45: #{tpu_custom_call.1} parent=11 // pred_check
          %p387 = pneg %p238
        $region46: #{tpu_custom_call.1} parent=11 // pred_check_branch
          %389 = sbr.rel (%p387) target = $region48
        $region47: #{tpu_custom_call.1} parent=11 // pred_region
          _
        $region48: #{tpu_custom_call.1} parent=11 // pred_fallthru
          _
        // Predicated region
        $region49: #{tpu_custom_call.1} parent=11 // pred_check
          %p390 = pneg %p259
        $region50: #{tpu_custom_call.1} parent=11 // pred_check_branch
          %392 = sbr.rel (%p390) target = $region52
        $region51: #{tpu_custom_call.1} parent=11 // pred_region
          _
        $region52: #{tpu_custom_call.1} parent=11 // pred_fallthru
          _
        // Predicated region
        $region53: #{tpu_custom_call.1} parent=11 // pred_check
          %p393 = pneg %p280
        $region54: #{tpu_custom_call.1} parent=11 // pred_check_branch
          %395 = sbr.rel (%p393) target = $region56
        $region55: #{tpu_custom_call.1} parent=11 // pred_region
          _
        $region56: #{tpu_custom_call.1} parent=11 // pred_fallthru
          _
        // Predicated region
        $region57: #{tpu_custom_call.1} parent=11 // pred_check
          %p396 = pneg %p301
        $region58: #{tpu_custom_call.1} parent=11 // pred_check_branch
          %398 = sbr.rel (%p396) target = $region60
        $region59: #{tpu_custom_call.1} parent=11 // pred_region
          _
        $region60: #{tpu_custom_call.1} parent=11 // pred_fallthru
          _
        // Predicated region
        $region61: #{tpu_custom_call.1} parent=11 // pred_check
          %p399 = pneg %p322
        $region62: #{tpu_custom_call.1} parent=11 // pred_check_branch
          %401 = sbr.rel (%p399) target = $region64
        $region63: #{tpu_custom_call.1} parent=11 // pred_region
          _
        $region64: #{tpu_custom_call.1} parent=11 // pred_fallthru
          _
      $region12: #{tpu_custom_call.1} parent=5 // pred_fallthru
        _
      %p402 = scmp.lt.s32.totalorder %s23, 2
      // Predicated region
      $region65: #{tpu_custom_call.1} parent=5 // pred_check
        %p403 = pneg %p402
      $region66: #{tpu_custom_call.1} parent=5 // pred_check_branch
        %405 = sbr.rel (%p403) target = $region68
      $region67: #{tpu_custom_call.1} parent=5 // pred_region
        // Predicated region
        $region69: #{tpu_custom_call.1} parent=67 // pred_check
          %p406 = pneg %p43
        $region70: #{tpu_custom_call.1} parent=67 // pred_check_branch
          %408 = sbr.rel (%p406) target = $region72
        $region71: #{tpu_custom_call.1} parent=67 // pred_region
          %p409 = scmp.lt.s32.totalorder %s23, 1
          %s410 = scalar_select %p409, %s23, 1
          %s411 = smul.addr %s410, 8
          %s412 = scalar_lea.vmem %s0, %s411
        $region72: #{tpu_custom_call.1} parent=67 // pred_fallthru
          _
      $region68: #{tpu_custom_call.1} parent=5 // pred_fallthru
        _
      %p413 = scmp.le.s32.totalorder 1, %s23
      %p414 = scmp.lt.s32.totalorder %s23, 3
      %p415 = pnand %p413, %p414
      %p416 = pneg %p415
      // Predicated region
      $region73: #{tpu_custom_call.1} parent=5 // pred_check
        _
      $region74: #{tpu_custom_call.1} parent=5 // pred_check_branch
        %418 = sbr.rel (%p415) target = $region76
      $region75: #{tpu_custom_call.1} parent=5 // pred_region
        %s419 = ssub.s32 %s23, 1
        %p420 = scmp.lt.s32.totalorder %s28, 1
        %s421 = scalar_select %p420, %s28, 1
        %s422 = smul.addr %s421, 8
        %s423 = scalar_lea.vmem %s0, %s422
        %p424 = pneg %p49
        %p425 = pneg %p46
        %p426 = pneg %p70
        %p427 = pneg %p67
        %p428 = pneg %p91
        %p429 = pneg %p88
        %p430 = pneg %p112
        %p431 = pneg %p109
        %p432 = pneg %p133
        %p433 = pneg %p130
        %p434 = pneg %p154
        %p435 = pneg %p151
        %p436 = pneg %p175
        %p437 = pneg %p172
        %p438 = pneg %p196
        %p439 = pneg %p193
        %p440 = pneg %p217
        %p441 = pneg %p214
        %p442 = pneg %p238
        %p443 = pneg %p235
        %p444 = pneg %p259
        %p445 = pneg %p256
        %p446 = pneg %p280
        %p447 = pneg %p277
        %p448 = pneg %p301
        %p449 = pneg %p298
        %p450 = pneg %p322
        %p451 = pneg %p319
        %p452 = pneg %p348
        %p453 = pneg %p345
        %s454 = sand.u32 %s335, 1
        %s455 = scalar_lea.sflag [#allocation3], %s454
        %s456 = sand.u32 %s335, 1
        %s457 = smul.addr %s456, 8
        %s458 = scalar_lea.vmem [#allocation2], %s457
        %p459 = scmp.lt.s32.totalorder %s28, 1
        %s460 = scalar_select %p459, %s28, 1
        %s461 = smul.addr %s460, 8
        %s462 = scalar_lea.vmem %s0, %s461
        %v464 = vld [vmem:[%s462] sm:$0xff]
        %v465 = vld [vmem:[%s1] sm:$0x1]
        %v466 = vld [vmem:[%s2] sm:$0x1]
        %vm467 = vcmask 261120
        %v468 = vsel %vm467, %v464, 0.0
        %469 = vadd.xlane.f32.xlu0 %v468
        %v470 = vpop.xlane.xlu0 %469
        %v471 = vrcp.pop 32.0
        %v472 = vmul.f32 %v470, %v471
        %v473 = vsub.f32 %v464, %v472
        %v474 = vmul.f32 %v473, %v473
        %v475 = vsel %vm467, %v474, 0.0
        %476 = vadd.xlane.f32.xlu0 %v475
        %v477 = vpop.xlane.xlu0 %476
        %v478 = vmul.f32 %v477, %v471
        %v479 = vadd.f32 %v478, 1e-05
        %v480 = vrsqrt.pop %v479
        %v481 = vmul.f32 %v473, %v480
        %v483 = vlaneseq
        %v484 = vshrl.u32 %v483, 7
        %v485 = vsub.s32 0, %v484
        %v486 = vrot.slane %v465, %v485
        %v488 = vmul.f32 %v481, %v486
        %v490 = vlaneseq
        %v491 = vshrl.u32 %v490, 7
        %v492 = vsub.s32 0, %v491
        %v493 = vrot.slane %v466, %v492
        %v495 = vadd.f32 %v488, %v493
        %v496 = vpack.c.bf16 %v495, %v495
        %v497 = vld [vmem:[%s3] sm:$0xf]
        %v498 = vld [vmem:[%s3 + $0x4] sm:$0xf]
        %v499 = vld [vmem:[%s3 + $0x8] sm:$0xf]
        %v500 = vld [vmem:[%s3 + $0xc] sm:$0xf]
        %v501 = vld [vmem:[%s3 + $0x10] sm:$0xf]
        %v502 = vld [vmem:[%s3 + $0x14] sm:$0xf]
        %v503 = vld [vmem:[%s3 + $0x18] sm:$0xf]
        %v504 = vld [vmem:[%s3 + $0x1c] sm:$0xf]
        %v505 = vld [vmem:[%s3 + $0x20] sm:$0xf]
        %v506 = vld [vmem:[%s3 + $0x24] sm:$0xf]
        %v507 = vld [vmem:[%s3 + $0x28] sm:$0xf]
        %v508 = vld [vmem:[%s3 + $0x2c] sm:$0xf]
        %v509 = vld [vmem:[%s3 + $0x30] sm:$0xf]
        %v510 = vld [vmem:[%s3 + $0x34] sm:$0xf]
        %v511 = vld [vmem:[%s3 + $0x38] sm:$0xf]
        %v512 = vld [vmem:[%s3 + $0x3c] sm:$0xf]
        %v517 = vunpack.c.l.b16 %v497
        %v518 = vunpack.c.l.b16 %v498
        %v519 = vunpack.c.l.b16 %v499
        %v520 = vunpack.c.l.b16 %v500
        %v521 = vpack.c.b16 %v518, %v517
        %v522 = vpack.c.b16 %v520, %v519
        %v526 = vsel %vm467, %v496, 0
        %528 = vmatprep.subr.bf16.mxu0 0
        %529 = vmatpush1.bf16.msra.mxu0 0
        %530 = vmatprep.subr.bf16.mxu0 0
        %531 = vmatpush1.bf16.msra.mxu0 0
        %532 = vmatprep.subr.bf16.mxu0 0
        %533 = vmatpush1.bf16.msra.mxu0 0
        %534 = vmatprep.subr.bf16.mxu0 0
        %535 = vmatpush1.bf16.msra.mxu0 0
        %536 = vmatprep.subr.bf16.mxu0 0
        %537 = vmatpush1.bf16.msra.mxu0 0
        %538 = vmatprep.subr.bf16.mxu0 0
        %539 = vmatpush1.bf16.msra.mxu0 0
        %540 = vmatprep.subr.bf16.mxu0 0
        %541 = vmatpush1.bf16.msra.mxu0 %v522
        %542 = vmatprep.subr.bf16.mxu0 0
        %543 = vmatpush1.bf16.msra.mxu0 %v521
        %544 = vmatprep.subr.bf16.mxu0 0
        %545 = vmatpush2.bf16.msra.mxu0 0
        %546 = vmatprep.subr.bf16.mxu0 0
        %547 = vmatpush2.bf16.msra.mxu0 0
        %548 = vmatprep.subr.bf16.mxu0 0
        %549 = vmatpush2.bf16.msra.mxu0 0
        %550 = vmatprep.subr.bf16.mxu0 0
        %551 = vmatpush2.bf16.msra.mxu0 0
        %552 = vmatprep.subr.bf16.mxu0 0
        %553 = vmatpush2.bf16.msra.mxu0 0
        %554 = vmatprep.subr.bf16.mxu0 0
        %555 = vmatpush2.bf16.msra.mxu0 0
        %556 = vmatprep.subr.bf16.mxu0 0
        %557 = vmatpush2.bf16.msra.mxu0 0
        %558 = vmatprep.subr.bf16.mxu0 0
        %559 = vmatpush2.bf16.msra.mxu0 0
        %560 = vmatprep.mubr.bf16.mxu0 0
        %561 = vmatmul.mubr.bf16.gmra.mxu0 %v526
        %v562 = vpop.f32.mrf.mxu0
        %v563 = vadd.f32 0.0, %v562
        %v564 = vpop.f32.mrf.mxu0
        %v565 = vpop.f32.mrf.mxu0
        %v566 = vpop.f32.mrf.mxu0
        %567 = vdwg.mxu0
        %v572 = vunpack.c.l.b16 %v501
        %v573 = vunpack.c.l.b16 %v502
        %v574 = vunpack.c.l.b16 %v503
        %v575 = vunpack.c.l.b16 %v504
        %v576 = vpack.c.b16 %v573, %v572
        %v577 = vpack.c.b16 %v575, %v574
        %580 = vmatprep.subr.bf16.mxu0 0
        %581 = vmatpush1.bf16.msra.mxu0 0
        %582 = vmatprep.subr.bf16.mxu0 0
        %583 = vmatpush1.bf16.msra.mxu0 0
        %584 = vmatprep.subr.bf16.mxu0 0
        %585 = vmatpush1.bf16.msra.mxu0 0
        %586 = vmatprep.subr.bf16.mxu0 0
        %587 = vmatpush1.bf16.msra.mxu0 0
        %588 = vmatprep.subr.bf16.mxu0 0
        %589 = vmatpush1.bf16.msra.mxu0 0
        %590 = vmatprep.subr.bf16.mxu0 0
        %591 = vmatpush1.bf16.msra.mxu0 0
        %592 = vmatprep.subr.bf16.mxu0 0
        %593 = vmatpush1.bf16.msra.mxu0 %v577
        %594 = vmatprep.subr.bf16.mxu0 0
        %595 = vmatpush1.bf16.msra.mxu0 %v576
        %596 = vmatprep.subr.bf16.mxu0 0
        %597 = vmatpush2.bf16.msra.mxu0 0
        %598 = vmatprep.subr.bf16.mxu0 0
        %599 = vmatpush2.bf16.msra.mxu0 0
        %600 = vmatprep.subr.bf16.mxu0 0
        %601 = vmatpush2.bf16.msra.mxu0 0
        %602 = vmatprep.subr.bf16.mxu0 0
        %603 = vmatpush2.bf16.msra.mxu0 0
        %604 = vmatprep.subr.bf16.mxu0 0
        %605 = vmatpush2.bf16.msra.mxu0 0
        %606 = vmatprep.subr.bf16.mxu0 0
        %607 = vmatpush2.bf16.msra.mxu0 0
        %608 = vmatprep.subr.bf16.mxu0 0
        %609 = vmatpush2.bf16.msra.mxu0 0
        %610 = vmatprep.subr.bf16.mxu0 0
        %611 = vmatpush2.bf16.msra.mxu0 0
        %612 = vmatprep.mubr.bf16.mxu0 0
        %613 = vmatmul.mubr.bf16.gmra.mxu0 %v526
        %v614 = vpop.f32.mrf.mxu0
        %v615 = vadd.f32 0.0, %v614
        %v616 = vpop.f32.mrf.mxu0
        %v617 = vpop.f32.mrf.mxu0
        %v618 = vpop.f32.mrf.mxu0
        %619 = vdwg.mxu0
        %v624 = vunpack.c.l.b16 %v505
        %v625 = vunpack.c.l.b16 %v506
        %v626 = vunpack.c.l.b16 %v507
        %v627 = vunpack.c.l.b16 %v508
        %v628 = vpack.c.b16 %v625, %v624
        %v629 = vpack.c.b16 %v627, %v626
        %632 = vmatprep.subr.bf16.mxu0 0
        %633 = vmatpush1.bf16.msra.mxu0 0
        %634 = vmatprep.subr.bf16.mxu0 0
        %635 = vmatpush1.bf16.msra.mxu0 0
        %636 = vmatprep.subr.bf16.mxu0 0
        %637 = vmatpush1.bf16.msra.mxu0 0
        %638 = vmatprep.subr.bf16.mxu0 0
        %639 = vmatpush1.bf16.msra.mxu0 0
        %640 = vmatprep.subr.bf16.mxu0 0
        %641 = vmatpush1.bf16.msra.mxu0 0
        %642 = vmatprep.subr.bf16.mxu0 0
        %643 = vmatpush1.bf16.msra.mxu0 0
        %644 = vmatprep.subr.bf16.mxu0 0
        %645 = vmatpush1.bf16.msra.mxu0 %v629
        %646 = vmatprep.subr.bf16.mxu0 0
        %647 = vmatpush1.bf16.msra.mxu0 %v628
        %648 = vmatprep.subr.bf16.mxu0 0
        %649 = vmatpush2.bf16.msra.mxu0 0
        %650 = vmatprep.subr.bf16.mxu0 0
        %651 = vmatpush2.bf16.msra.mxu0 0
        %652 = vmatprep.subr.bf16.mxu0 0
        %653 = vmatpush2.bf16.msra.mxu0 0
        %654 = vmatprep.subr.bf16.mxu0 0
        %655 = vmatpush2.bf16.msra.mxu0 0
        %656 = vmatprep.subr.bf16.mxu0 0
        %657 = vmatpush2.bf16.msra.mxu0 0
        %658 = vmatprep.subr.bf16.mxu0 0
        %659 = vmatpush2.bf16.msra.mxu0 0
        %660 = vmatprep.subr.bf16.mxu0 0
        %661 = vmatpush2.bf16.msra.mxu0 0
        %662 = vmatprep.subr.bf16.mxu0 0
        %663 = vmatpush2.bf16.msra.mxu0 0
        %664 = vmatprep.mubr.bf16.mxu0 0
        %665 = vmatmul.mubr.bf16.gmra.mxu0 %v526
        %v666 = vpop.f32.mrf.mxu0
        %v667 = vadd.f32 0.0, %v666
        %v668 = vpop.f32.mrf.mxu0
        %v669 = vpop.f32.mrf.mxu0
        %v670 = vpop.f32.mrf.mxu0
        %671 = vdwg.mxu0
        %v676 = vunpack.c.l.b16 %v509
        %v677 = vunpack.c.l.b16 %v510
        %v678 = vunpack.c.l.b16 %v511
        %v679 = vunpack.c.l.b16 %v512
        %v680 = vpack.c.b16 %v677, %v676
        %v681 = vpack.c.b16 %v679, %v678
        %684 = vmatprep.subr.bf16.mxu0 0
        %685 = vmatpush1.bf16.msra.mxu0 0
        %686 = vmatprep.subr.bf16.mxu0 0
        %687 = vmatpush1.bf16.msra.mxu0 0
        %688 = vmatprep.subr.bf16.mxu0 0
        %689 = vmatpush1.bf16.msra.mxu0 0
        %690 = vmatprep.subr.bf16.mxu0 0
        %691 = vmatpush1.bf16.msra.mxu0 0
        %692 = vmatprep.subr.bf16.mxu0 0
        %693 = vmatpush1.bf16.msra.mxu0 0
        %694 = vmatprep.subr.bf16.mxu0 0
        %695 = vmatpush1.bf16.msra.mxu0 0
        %696 = vmatprep.subr.bf16.mxu0 0
        %697 = vmatpush1.bf16.msra.mxu0 %v681
        %698 = vmatprep.subr.bf16.mxu0 0
        %699 = vmatpush1.bf16.msra.mxu0 %v680
        %700 = vmatprep.subr.bf16.mxu0 0
        %701 = vmatpush2.bf16.msra.mxu0 0
        %702 = vmatprep.subr.bf16.mxu0 0
        %703 = vmatpush2.bf16.msra.mxu0 0
        %704 = vmatprep.subr.bf16.mxu0 0
        %705 = vmatpush2.bf16.msra.mxu0 0
        %706 = vmatprep.subr.bf16.mxu0 0
        %707 = vmatpush2.bf16.msra.mxu0 0
        %708 = vmatprep.subr.bf16.mxu0 0
        %709 = vmatpush2.bf16.msra.mxu0 0
        %710 = vmatprep.subr.bf16.mxu0 0
        %711 = vmatpush2.bf16.msra.mxu0 0
        %712 = vmatprep.subr.bf16.mxu0 0
        %713 = vmatpush2.bf16.msra.mxu0 0
        %714 = vmatprep.subr.bf16.mxu0 0
        %715 = vmatpush2.bf16.msra.mxu0 0
        %716 = vmatprep.mubr.bf16.mxu0 0
        %717 = vmatmul.mubr.bf16.gmra.mxu0 %v526
        %v718 = vpop.f32.mrf.mxu0
        %v719 = vadd.f32 0.0, %v718
        %v720 = vpop.f32.mrf.mxu0
        %v721 = vpop.f32.mrf.mxu0
        %v722 = vpop.f32.mrf.mxu0
        %723 = vdwg.mxu0
        %v724 = vld [vmem:[%s4] sm:$0xf]
        %v725 = vld [vmem:[%s4 + $0x4] sm:$0xf]
        %v726 = vld [vmem:[%s4 + $0x8] sm:$0xf]
        %v727 = vld [vmem:[%s4 + $0xc] sm:$0xf]
        %v728 = vld [vmem:[%s4 + $0x10] sm:$0xf]
        %v729 = vld [vmem:[%s4 + $0x14] sm:$0xf]
        %v730 = vld [vmem:[%s4 + $0x18] sm:$0xf]
        %v731 = vld [vmem:[%s4 + $0x1c] sm:$0xf]
        %v732 = vld [vmem:[%s4 + $0x20] sm:$0xf]
        %v733 = vld [vmem:[%s4 + $0x24] sm:$0xf]
        %v734 = vld [vmem:[%s4 + $0x28] sm:$0xf]
        %v735 = vld [vmem:[%s4 + $0x2c] sm:$0xf]
        %v736 = vld [vmem:[%s4 + $0x30] sm:$0xf]
        %v737 = vld [vmem:[%s4 + $0x34] sm:$0xf]
        %v738 = vld [vmem:[%s4 + $0x38] sm:$0xf]
        %v739 = vld [vmem:[%s4 + $0x3c] sm:$0xf]
        %v744 = vunpack.c.l.b16 %v724
        %v745 = vunpack.c.l.b16 %v725
        %v746 = vunpack.c.l.b16 %v726
        %v747 = vunpack.c.l.b16 %v727
        %v748 = vpack.c.b16 %v745, %v744
        %v749 = vpack.c.b16 %v747, %v746
        %752 = vmatprep.subr.bf16.mxu0 0
        %753 = vmatpush1.bf16.msra.mxu0 0
        %754 = vmatprep.subr.bf16.mxu0 0
        %755 = vmatpush1.bf16.msra.mxu0 0
        %756 = vmatprep.subr.bf16.mxu0 0
        %757 = vmatpush1.bf16.msra.mxu0 0
        %758 = vmatprep.subr.bf16.mxu0 0
        %759 = vmatpush1.bf16.msra.mxu0 0
        %760 = vmatprep.subr.bf16.mxu0 0
        %761 = vmatpush1.bf16.msra.mxu0 0
        %762 = vmatprep.subr.bf16.mxu0 0
        %763 = vmatpush1.bf16.msra.mxu0 0
        %764 = vmatprep.subr.bf16.mxu0 0
        %765 = vmatpush1.bf16.msra.mxu0 %v749
        %766 = vmatprep.subr.bf16.mxu0 0
        %767 = vmatpush1.bf16.msra.mxu0 %v748
        %768 = vmatprep.subr.bf16.mxu0 0
        %769 = vmatpush2.bf16.msra.mxu0 0
        %770 = vmatprep.subr.bf16.mxu0 0
        %771 = vmatpush2.bf16.msra.mxu0 0
        %772 = vmatprep.subr.bf16.mxu0 0
        %773 = vmatpush2.bf16.msra.mxu0 0
        %774 = vmatprep.subr.bf16.mxu0 0
        %775 = vmatpush2.bf16.msra.mxu0 0
        %776 = vmatprep.subr.bf16.mxu0 0
        %777 = vmatpush2.bf16.msra.mxu0 0
        %778 = vmatprep.subr.bf16.mxu0 0
        %779 = vmatpush2.bf16.msra.mxu0 0
        %780 = vmatprep.subr.bf16.mxu0 0
        %781 = vmatpush2.bf16.msra.mxu0 0
        %782 = vmatprep.subr.bf16.mxu0 0
        %783 = vmatpush2.bf16.msra.mxu0 0
        %784 = vmatprep.mubr.bf16.mxu0 0
        %785 = vmatmul.mubr.bf16.gmra.mxu0 %v526
        %v786 = vpop.f32.mrf.mxu0
        %v787 = vadd.f32 0.0, %v786
        %v788 = vpop.f32.mrf.mxu0
        %v789 = vpop.f32.mrf.mxu0
        %v790 = vpop.f32.mrf.mxu0
        %791 = vdwg.mxu0
        %v796 = vunpack.c.l.b16 %v728
        %v797 = vunpack.c.l.b16 %v729
        %v798 = vunpack.c.l.b16 %v730
        %v799 = vunpack.c.l.b16 %v731
        %v800 = vpack.c.b16 %v797, %v796
        %v801 = vpack.c.b16 %v799, %v798
        %804 = vmatprep.subr.bf16.mxu0 0
        %805 = vmatpush1.bf16.msra.mxu0 0
        %806 = vmatprep.subr.bf16.mxu0 0
        %807 = vmatpush1.bf16.msra.mxu0 0
        %808 = vmatprep.subr.bf16.mxu0 0
        %809 = vmatpush1.bf16.msra.mxu0 0
        %810 = vmatprep.subr.bf16.mxu0 0
        %811 = vmatpush1.bf16.msra.mxu0 0
        %812 = vmatprep.subr.bf16.mxu0 0
        %813 = vmatpush1.bf16.msra.mxu0 0
        %814 = vmatprep.subr.bf16.mxu0 0
        %815 = vmatpush1.bf16.msra.mxu0 0
        %816 = vmatprep.subr.bf16.mxu0 0
        %817 = vmatpush1.bf16.msra.mxu0 %v801
        %818 = vmatprep.subr.bf16.mxu0 0
        %819 = vmatpush1.bf16.msra.mxu0 %v800
        %820 = vmatprep.subr.bf16.mxu0 0
        %821 = vmatpush2.bf16.msra.mxu0 0
        %822 = vmatprep.subr.bf16.mxu0 0
        %823 = vmatpush2.bf16.msra.mxu0 0
        %824 = vmatprep.subr.bf16.mxu0 0
        %825 = vmatpush2.bf16.msra.mxu0 0
        %826 = vmatprep.subr.bf16.mxu0 0
        %827 = vmatpush2.bf16.msra.mxu0 0
        %828 = vmatprep.subr.bf16.mxu0 0
        %829 = vmatpush2.bf16.msra.mxu0 0
        %830 = vmatprep.subr.bf16.mxu0 0
        %831 = vmatpush2.bf16.msra.mxu0 0
        %832 = vmatprep.subr.bf16.mxu0 0
        %833 = vmatpush2.bf16.msra.mxu0 0
        %834 = vmatprep.subr.bf16.mxu0 0
        %835 = vmatpush2.bf16.msra.mxu0 0
        %836 = vmatprep.mubr.bf16.mxu0 0
        %837 = vmatmul.mubr.bf16.gmra.mxu0 %v526
        %v838 = vpop.f32.mrf.mxu0
        %v839 = vadd.f32 0.0, %v838
        %v840 = vpop.f32.mrf.mxu0
        %v841 = vpop.f32.mrf.mxu0
        %v842 = vpop.f32.mrf.mxu0
        %843 = vdwg.mxu0
        %v848 = vunpack.c.l.b16 %v732
        %v849 = vunpack.c.l.b16 %v733
        %v850 = vunpack.c.l.b16 %v734
        %v851 = vunpack.c.l.b16 %v735
        %v852 = vpack.c.b16 %v849, %v848
        %v853 = vpack.c.b16 %v851, %v850
        %856 = vmatprep.subr.bf16.mxu0 0
        %857 = vmatpush1.bf16.msra.mxu0 0
        %858 = vmatprep.subr.bf16.mxu0 0
        %859 = vmatpush1.bf16.msra.mxu0 0
        %860 = vmatprep.subr.bf16.mxu0 0
        %861 = vmatpush1.bf16.msra.mxu0 0
        %862 = vmatprep.subr.bf16.mxu0 0
        %863 = vmatpush1.bf16.msra.mxu0 0
        %864 = vmatprep.subr.bf16.mxu0 0
        %865 = vmatpush1.bf16.msra.mxu0 0
        %866 = vmatprep.subr.bf16.mxu0 0
        %867 = vmatpush1.bf16.msra.mxu0 0
        %868 = vmatprep.subr.bf16.mxu0 0
        %869 = vmatpush1.bf16.msra.mxu0 %v853
        %870 = vmatprep.subr.bf16.mxu0 0
        %871 = vmatpush1.bf16.msra.mxu0 %v852
        %872 = vmatprep.subr.bf16.mxu0 0
        %873 = vmatpush2.bf16.msra.mxu0 0
        %874 = vmatprep.subr.bf16.mxu0 0
        %875 = vmatpush2.bf16.msra.mxu0 0
        %876 = vmatprep.subr.bf16.mxu0 0
        %877 = vmatpush2.bf16.msra.mxu0 0
        %878 = vmatprep.subr.bf16.mxu0 0
        %879 = vmatpush2.bf16.msra.mxu0 0
        %880 = vmatprep.subr.bf16.mxu0 0
        %881 = vmatpush2.bf16.msra.mxu0 0
        %882 = vmatprep.subr.bf16.mxu0 0
        %883 = vmatpush2.bf16.msra.mxu0 0
        %884 = vmatprep.subr.bf16.mxu0 0
        %885 = vmatpush2.bf16.msra.mxu0 0
        %886 = vmatprep.subr.bf16.mxu0 0
        %887 = vmatpush2.bf16.msra.mxu0 0
        %888 = vmatprep.mubr.bf16.mxu0 0
        %889 = vmatmul.mubr.bf16.gmra.mxu0 %v526
        %v890 = vpop.f32.mrf.mxu0
        %v891 = vadd.f32 0.0, %v890
        %v892 = vpop.f32.mrf.mxu0
        %v893 = vpop.f32.mrf.mxu0
        %v894 = vpop.f32.mrf.mxu0
        %895 = vdwg.mxu0
        %v900 = vunpack.c.l.b16 %v736
        %v901 = vunpack.c.l.b16 %v737
        %v902 = vunpack.c.l.b16 %v738
        %v903 = vunpack.c.l.b16 %v739
        %v904 = vpack.c.b16 %v901, %v900
        %v905 = vpack.c.b16 %v903, %v902
        %908 = vmatprep.subr.bf16.mxu0 0
        %909 = vmatpush1.bf16.msra.mxu0 0
        %910 = vmatprep.subr.bf16.mxu0 0
        %911 = vmatpush1.bf16.msra.mxu0 0
        %912 = vmatprep.subr.bf16.mxu0 0
        %913 = vmatpush1.bf16.msra.mxu0 0
        %914 = vmatprep.subr.bf16.mxu0 0
        %915 = vmatpush1.bf16.msra.mxu0 0
        %916 = vmatprep.subr.bf16.mxu0 0
        %917 = vmatpush1.bf16.msra.mxu0 0
        %918 = vmatprep.subr.bf16.mxu0 0
        %919 = vmatpush1.bf16.msra.mxu0 0
        %920 = vmatprep.subr.bf16.mxu0 0
        %921 = vmatpush1.bf16.msra.mxu0 %v905
        %922 = vmatprep.subr.bf16.mxu0 0
        %923 = vmatpush1.bf16.msra.mxu0 %v904
        %924 = vmatprep.subr.bf16.mxu0 0
        %925 = vmatpush2.bf16.msra.mxu0 0
        %926 = vmatprep.subr.bf16.mxu0 0
        %927 = vmatpush2.bf16.msra.mxu0 0
        %928 = vmatprep.subr.bf16.mxu0 0
        %929 = vmatpush2.bf16.msra.mxu0 0
        %930 = vmatprep.subr.bf16.mxu0 0
        %931 = vmatpush2.bf16.msra.mxu0 0
        %932 = vmatprep.subr.bf16.mxu0 0
        %933 = vmatpush2.bf16.msra.mxu0 0
        %934 = vmatprep.subr.bf16.mxu0 0
        %935 = vmatpush2.bf16.msra.mxu0 0
        %936 = vmatprep.subr.bf16.mxu0 0
        %937 = vmatpush2.bf16.msra.mxu0 0
        %938 = vmatprep.subr.bf16.mxu0 0
        %939 = vmatpush2.bf16.msra.mxu0 0
        %940 = vmatprep.mubr.bf16.mxu0 0
        %941 = vmatmul.mubr.bf16.gmra.mxu0 %v526
        %v942 = vpop.f32.mrf.mxu0
        %v943 = vadd.f32 0.0, %v942
        %v944 = vpop.f32.mrf.mxu0
        %v945 = vpop.f32.mrf.mxu0
        %v946 = vpop.f32.mrf.mxu0
        %947 = vdwg.mxu0
        %v948 = vld [vmem:[%s5] sm:$0xf]
        %v949 = vld [vmem:[%s5 + $0x4] sm:$0xf]
        %v950 = vld [vmem:[%s5 + $0x8] sm:$0xf]
        %v951 = vld [vmem:[%s5 + $0xc] sm:$0xf]
        %v952 = vld [vmem:[%s5 + $0x10] sm:$0xf]
        %v953 = vld [vmem:[%s5 + $0x14] sm:$0xf]
        %v954 = vld [vmem:[%s5 + $0x18] sm:$0xf]
        %v955 = vld [vmem:[%s5 + $0x1c] sm:$0xf]
        %v956 = vld [vmem:[%s5 + $0x20] sm:$0xf]
        %v957 = vld [vmem:[%s5 + $0x24] sm:$0xf]
        %v958 = vld [vmem:[%s5 + $0x28] sm:$0xf]
        %v959 = vld [vmem:[%s5 + $0x2c] sm:$0xf]
        %v960 = vld [vmem:[%s5 + $0x30] sm:$0xf]
        %v961 = vld [vmem:[%s5 + $0x34] sm:$0xf]
        %v962 = vld [vmem:[%s5 + $0x38] sm:$0xf]
        %v963 = vld [vmem:[%s5 + $0x3c] sm:$0xf]
        %v968 = vunpack.c.l.b16 %v948
        %v969 = vunpack.c.l.b16 %v949
        %v970 = vunpack.c.l.b16 %v950
        %v971 = vunpack.c.l.b16 %v951
        %v972 = vpack.c.b16 %v969, %v968
        %v973 = vpack.c.b16 %v971, %v970
        %976 = vmatprep.subr.bf16.mxu0 0
        %977 = vmatpush1.bf16.msra.mxu0 0
        %978 = vmatprep.subr.bf16.mxu0 0
        %979 = vmatpush1.bf16.msra.mxu0 0
        %980 = vmatprep.subr.bf16.mxu0 0
        %981 = vmatpush1.bf16.msra.mxu0 0
        %982 = vmatprep.subr.bf16.mxu0 0
        %983 = vmatpush1.bf16.msra.mxu0 0
        %984 = vmatprep.subr.bf16.mxu0 0
        %985 = vmatpush1.bf16.msra.mxu0 0
        %986 = vmatprep.subr.bf16.mxu0 0
        %987 = vmatpush1.bf16.msra.mxu0 0
        %988 = vmatprep.subr.bf16.mxu0 0
        %989 = vmatpush1.bf16.msra.mxu0 %v973
        %990 = vmatprep.subr.bf16.mxu0 0
        %991 = vmatpush1.bf16.msra.mxu0 %v972
        %992 = vmatprep.subr.bf16.mxu0 0
        %993 = vmatpush2.bf16.msra.mxu0 0
        %994 = vmatprep.subr.bf16.mxu0 0
        %995 = vmatpush2.bf16.msra.mxu0 0
        %996 = vmatprep.subr.bf16.mxu0 0
        %997 = vmatpush2.bf16.msra.mxu0 0
        %998 = vmatprep.subr.bf16.mxu0 0
        %999 = vmatpush2.bf16.msra.mxu0 0
        %1000 = vmatprep.subr.bf16.mxu0 0
        %1001 = vmatpush2.bf16.msra.mxu0 0
        %1002 = vmatprep.subr.bf16.mxu0 0
        %1003 = vmatpush2.bf16.msra.mxu0 0
        %1004 = vmatprep.subr.bf16.mxu0 0
        %1005 = vmatpush2.bf16.msra.mxu0 0
        %1006 = vmatprep.subr.bf16.mxu0 0
        %1007 = vmatpush2.bf16.msra.mxu0 0
        %1008 = vmatprep.mubr.bf16.mxu0 0
        %1009 = vmatmul.mubr.bf16.gmra.mxu0 %v526
        %v1010 = vpop.f32.mrf.mxu0
        %v1011 = vadd.f32 0.0, %v1010
        %v1012 = vpop.f32.mrf.mxu0
        %v1013 = vpop.f32.mrf.mxu0
        %v1014 = vpop.f32.mrf.mxu0
        %1015 = vdwg.mxu0
        %v1020 = vunpack.c.l.b16 %v952
        %v1021 = vunpack.c.l.b16 %v953
        %v1022 = vunpack.c.l.b16 %v954
        %v1023 = vunpack.c.l.b16 %v955
        %v1024 = vpack.c.b16 %v1021, %v1020
        %v1025 = vpack.c.b16 %v1023, %v1022
        %1028 = vmatprep.subr.bf16.mxu0 0
        %1029 = vmatpush1.bf16.msra.mxu0 0
        %1030 = vmatprep.subr.bf16.mxu0 0
        %1031 = vmatpush1.bf16.msra.mxu0 0
        %1032 = vmatprep.subr.bf16.mxu0 0
        %1033 = vmatpush1.bf16.msra.mxu0 0
        %1034 = vmatprep.subr.bf16.mxu0 0
        %1035 = vmatpush1.bf16.msra.mxu0 0
        %1036 = vmatprep.subr.bf16.mxu0 0
        %1037 = vmatpush1.bf16.msra.mxu0 0
        %1038 = vmatprep.subr.bf16.mxu0 0
        %1039 = vmatpush1.bf16.msra.mxu0 0
        %1040 = vmatprep.subr.bf16.mxu0 0
        %1041 = vmatpush1.bf16.msra.mxu0 %v1025
        %1042 = vmatprep.subr.bf16.mxu0 0
        %1043 = vmatpush1.bf16.msra.mxu0 %v1024
        %1044 = vmatprep.subr.bf16.mxu0 0
        %1045 = vmatpush2.bf16.msra.mxu0 0
        %1046 = vmatprep.subr.bf16.mxu0 0
        %1047 = vmatpush2.bf16.msra.mxu0 0
        %1048 = vmatprep.subr.bf16.mxu0 0
        %1049 = vmatpush2.bf16.msra.mxu0 0
        %1050 = vmatprep.subr.bf16.mxu0 0
        %1051 = vmatpush2.bf16.msra.mxu0 0
        %1052 = vmatprep.subr.bf16.mxu0 0
        %1053 = vmatpush2.bf16.msra.mxu0 0
        %1054 = vmatprep.subr.bf16.mxu0 0
        %1055 = vmatpush2.bf16.msra.mxu0 0
        %1056 = vmatprep.subr.bf16.mxu0 0
        %1057 = vmatpush2.bf16.msra.mxu0 0
        %1058 = vmatprep.subr.bf16.mxu0 0
        %1059 = vmatpush2.bf16.msra.mxu0 0
        %1060 = vmatprep.mubr.bf16.mxu0 0
        %1061 = vmatmul.mubr.bf16.gmra.mxu0 %v526
        %v1062 = vpop.f32.mrf.mxu0
        %v1063 = vadd.f32 0.0, %v1062
        %v1064 = vpop.f32.mrf.mxu0
        %v1065 = vpop.f32.mrf.mxu0
        %v1066 = vpop.f32.mrf.mxu0
        %1067 = vdwg.mxu0
        %v1072 = vunpack.c.l.b16 %v956
        %v1073 = vunpack.c.l.b16 %v957
        %v1074 = vunpack.c.l.b16 %v958
        %v1075 = vunpack.c.l.b16 %v959
        %v1076 = vpack.c.b16 %v1073, %v1072
        %v1077 = vpack.c.b16 %v1075, %v1074
        %1080 = vmatprep.subr.bf16.mxu0 0
        %1081 = vmatpush1.bf16.msra.mxu0 0
        %1082 = vmatprep.subr.bf16.mxu0 0
        %1083 = vmatpush1.bf16.msra.mxu0 0
        %1084 = vmatprep.subr.bf16.mxu0 0
        %1085 = vmatpush1.bf16.msra.mxu0 0
        %1086 = vmatprep.subr.bf16.mxu0 0
        %1087 = vmatpush1.bf16.msra.mxu0 0
        %1088 = vmatprep.subr.bf16.mxu0 0
        %1089 = vmatpush1.bf16.msra.mxu0 0
        %1090 = vmatprep.subr.bf16.mxu0 0
        %1091 = vmatpush1.bf16.msra.mxu0 0
        %1092 = vmatprep.subr.bf16.mxu0 0
        %1093 = vmatpush1.bf16.msra.mxu0 %v1077
        %1094 = vmatprep.subr.bf16.mxu0 0
        %1095 = vmatpush1.bf16.msra.mxu0 %v1076
        %1096 = vmatprep.subr.bf16.mxu0 0
        %1097 = vmatpush2.bf16.msra.mxu0 0
        %1098 = vmatprep.subr.bf16.mxu0 0
        %1099 = vmatpush2.bf16.msra.mxu0 0
        %1100 = vmatprep.subr.bf16.mxu0 0
        %1101 = vmatpush2.bf16.msra.mxu0 0
        %1102 = vmatprep.subr.bf16.mxu0 0
        %1103 = vmatpush2.bf16.msra.mxu0 0
        %1104 = vmatprep.subr.bf16.mxu0 0
        %1105 = vmatpush2.bf16.msra.mxu0 0
        %1106 = vmatprep.subr.bf16.mxu0 0
        %1107 = vmatpush2.bf16.msra.mxu0 0
        %1108 = vmatprep.subr.bf16.mxu0 0
        %1109 = vmatpush2.bf16.msra.mxu0 0
        %1110 = vmatprep.subr.bf16.mxu0 0
        %1111 = vmatpush2.bf16.msra.mxu0 0
        %1112 = vmatprep.mubr.bf16.mxu0 0
        %1113 = vmatmul.mubr.bf16.gmra.mxu0 %v526
        %v1114 = vpop.f32.mrf.mxu0
        %v1115 = vadd.f32 0.0, %v1114
        %v1116 = vpop.f32.mrf.mxu0
        %v1117 = vpop.f32.mrf.mxu0
        %v1118 = vpop.f32.mrf.mxu0
        %1119 = vdwg.mxu0
        %v1124 = vunpack.c.l.b16 %v960
        %v1125 = vunpack.c.l.b16 %v961
        %v1126 = vunpack.c.l.b16 %v962
        %v1127 = vunpack.c.l.b16 %v963
        %v1128 = vpack.c.b16 %v1125, %v1124
        %v1129 = vpack.c.b16 %v1127, %v1126
        %1132 = vmatprep.subr.bf16.mxu0 0
        %1133 = vmatpush1.bf16.msra.mxu0 0
        %1134 = vmatprep.subr.bf16.mxu0 0
        %1135 = vmatpush1.bf16.msra.mxu0 0
        %1136 = vmatprep.subr.bf16.mxu0 0
        %1137 = vmatpush1.bf16.msra.mxu0 0
        %1138 = vmatprep.subr.bf16.mxu0 0
        %1139 = vmatpush1.bf16.msra.mxu0 0
        %1140 = vmatprep.subr.bf16.mxu0 0
        %1141 = vmatpush1.bf16.msra.mxu0 0
        %1142 = vmatprep.subr.bf16.mxu0 0
        %1143 = vmatpush1.bf16.msra.mxu0 0
        %1144 = vmatprep.subr.bf16.mxu0 0
        %1145 = vmatpush1.bf16.msra.mxu0 %v1129
        %1146 = vmatprep.subr.bf16.mxu0 0
        %1147 = vmatpush1.bf16.msra.mxu0 %v1128
        %1148 = vmatprep.subr.bf16.mxu0 0
        %1149 = vmatpush2.bf16.msra.mxu0 0
        %1150 = vmatprep.subr.bf16.mxu0 0
        %1151 = vmatpush2.bf16.msra.mxu0 0
        %1152 = vmatprep.subr.bf16.mxu0 0
        %1153 = vmatpush2.bf16.msra.mxu0 0
        %1154 = vmatprep.subr.bf16.mxu0 0
        %1155 = vmatpush2.bf16.msra.mxu0 0
        %1156 = vmatprep.subr.bf16.mxu0 0
        %1157 = vmatpush2.bf16.msra.mxu0 0
        %1158 = vmatprep.subr.bf16.mxu0 0
        %1159 = vmatpush2.bf16.msra.mxu0 0
        %1160 = vmatprep.subr.bf16.mxu0 0
        %1161 = vmatpush2.bf16.msra.mxu0 0
        %1162 = vmatprep.subr.bf16.mxu0 0
        %1163 = vmatpush2.bf16.msra.mxu0 0
        %1164 = vmatprep.mubr.bf16.mxu0 0
        %1165 = vmatmul.mubr.bf16.gmra.mxu0 %v526
        %v1166 = vpop.f32.mrf.mxu0
        %v1167 = vadd.f32 0.0, %v1166
        %v1168 = vpop.f32.mrf.mxu0
        %v1169 = vpop.f32.mrf.mxu0
        %v1170 = vpop.f32.mrf.mxu0
        %1171 = vdwg.mxu0
        %v1172 = vpack.c.bf16 %v563, %v563
        %v1173 = vpack.c.bf16 %v615, %v615
        %v1174 = vpack.c.bf16 %v667, %v667
        %v1175 = vpack.c.bf16 %v719, %v719
        %v1176 = vpack.c.bf16 %v787, %v787
        %v1177 = vpack.c.bf16 %v839, %v839
        %v1178 = vpack.c.bf16 %v891, %v891
        %v1179 = vpack.c.bf16 %v943, %v943
        %vm1180 = vcmask 64512
        %v1182 = vsel %vm1180, %v1172, 0
        %v1185 = vsel %vm1180, %v1176, 0
        %1187 = vmatprep.subr.bf16.mxu0 0
        %1188 = vmatpush1.bf16.xpose.msra.mxu0 0
        %1189 = vmatprep.subr.bf16.mxu0 0
        %1190 = vmatpush1.bf16.xpose.msra.mxu0 0
        %1191 = vmatprep.subr.bf16.mxu0 0
        %1192 = vmatpush1.bf16.xpose.msra.mxu0 0
        %1193 = vmatprep.subr.bf16.mxu0 0
        %1194 = vmatpush1.bf16.xpose.msra.mxu0 0
        %1195 = vmatprep.subr.bf16.mxu0 0
        %1196 = vmatpush1.bf16.xpose.msra.mxu0 0
        %1197 = vmatprep.subr.bf16.mxu0 0
        %1198 = vmatpush1.bf16.xpose.msra.mxu0 0
        %1199 = vmatprep.subr.bf16.mxu0 0
        %1200 = vmatpush1.bf16.xpose.msra.mxu0 0
        %1201 = vmatprep.subr.bf16.mxu0 0
        %1202 = vmatpush1.bf16.xpose.msra.mxu0 %v1185
        %1203 = vmatprep.subr.bf16.mxu0 0
        %1204 = vmatpush2.bf16.xpose.msra.mxu0 0
        %1205 = vmatprep.subr.bf16.mxu0 0
        %1206 = vmatpush2.bf16.xpose.msra.mxu0 0
        %1207 = vmatprep.subr.bf16.mxu0 0
        %1208 = vmatpush2.bf16.xpose.msra.mxu0 0
        %1209 = vmatprep.subr.bf16.mxu0 0
        %1210 = vmatpush2.bf16.xpose.msra.mxu0 0
        %1211 = vmatprep.subr.bf16.mxu0 0
        %1212 = vmatpush2.bf16.xpose.msra.mxu0 0
        %1213 = vmatprep.subr.bf16.mxu0 0
        %1214 = vmatpush2.bf16.xpose.msra.mxu0 0
        %1215 = vmatprep.subr.bf16.mxu0 0
        %1216 = vmatpush2.bf16.xpose.msra.mxu0 0
        %1217 = vmatprep.subr.bf16.mxu0 0
        %1218 = vmatpush2.bf16.xpose.msra.mxu0 0
        %1219 = vmatprep.mubr.bf16.mxu0 0
        %1220 = vmatmul.mubr.bf16.gmra.mxu0 %v1182
        %v1221 = vpop.f32.mrf.mxu0
        %v1222 = vadd.f32 0.0, %v1221
        %v1223 = vpop.f32.mrf.mxu0
        %v1224 = vpop.f32.mrf.mxu0
        %v1225 = vpop.f32.mrf.mxu0
        %1226 = vdwg.mxu0
        %v1228 = vsel %vm1180, %v1173, 0
        %v1231 = vsel %vm1180, %v1177, 0
        %1233 = vmatprep.subr.bf16.mxu0 0
        %1234 = vmatpush1.bf16.xpose.msra.mxu0 0
        %1235 = vmatprep.subr.bf16.mxu0 0
        %1236 = vmatpush1.bf16.xpose.msra.mxu0 0
        %1237 = vmatprep.subr.bf16.mxu0 0
        %1238 = vmatpush1.bf16.xpose.msra.mxu0 0
        %1239 = vmatprep.subr.bf16.mxu0 0
        %1240 = vmatpush1.bf16.xpose.msra.mxu0 0
        %1241 = vmatprep.subr.bf16.mxu0 0
        %1242 = vmatpush1.bf16.xpose.msra.mxu0 0
        %1243 = vmatprep.subr.bf16.mxu0 0
        %1244 = vmatpush1.bf16.xpose.msra.mxu0 0
        %1245 = vmatprep.subr.bf16.mxu0 0
        %1246 = vmatpush1.bf16.xpose.msra.mxu0 0
        %1247 = vmatprep.subr.bf16.mxu0 0
        %1248 = vmatpush1.bf16.xpose.msra.mxu0 %v1231
        %1249 = vmatprep.subr.bf16.mxu0 0
        %1250 = vmatpush2.bf16.xpose.msra.mxu0 0
        %1251 = vmatprep.subr.bf16.mxu0 0
        %1252 = vmatpush2.bf16.xpose.msra.mxu0 0
        %1253 = vmatprep.subr.bf16.mxu0 0
        %1254 = vmatpush2.bf16.xpose.msra.mxu0 0
        %1255 = vmatprep.subr.bf16.mxu0 0
        %1256 = vmatpush2.bf16.xpose.msra.mxu0 0
        %1257 = vmatprep.subr.bf16.mxu0 0
        %1258 = vmatpush2.bf16.xpose.msra.mxu0 0
        %1259 = vmatprep.subr.bf16.mxu0 0
        %1260 = vmatpush2.bf16.xpose.msra.mxu0 0
        %1261 = vmatprep.subr.bf16.mxu0 0
        %1262 = vmatpush2.bf16.xpose.msra.mxu0 0
        %1263 = vmatprep.subr.bf16.mxu0 0
        %1264 = vmatpush2.bf16.xpose.msra.mxu0 0
        %1265 = vmatprep.mubr.bf16.mxu0 0
        %1266 = vmatmul.mubr.bf16.gmra.mxu0 %v1228
        %v1267 = vpop.f32.mrf.mxu0
        %v1268 = vadd.f32 0.0, %v1267
        %v1269 = vpop.f32.mrf.mxu0
        %v1270 = vpop.f32.mrf.mxu0
        %v1271 = vpop.f32.mrf.mxu0
        %1272 = vdwg.mxu0
        %v1274 = vsel %vm1180, %v1174, 0
        %v1277 = vsel %vm1180, %v1178, 0
        %1279 = vmatprep.subr.bf16.mxu0 0
        %1280 = vmatpush1.bf16.xpose.msra.mxu0 0
        %1281 = vmatprep.subr.bf16.mxu0 0
        %1282 = vmatpush1.bf16.xpose.msra.mxu0 0
        %1283 = vmatprep.subr.bf16.mxu0 0
        %1284 = vmatpush1.bf16.xpose.msra.mxu0 0
        %1285 = vmatprep.subr.bf16.mxu0 0
        %1286 = vmatpush1.bf16.xpose.msra.mxu0 0
        %1287 = vmatprep.subr.bf16.mxu0 0
        %1288 = vmatpush1.bf16.xpose.msra.mxu0 0
        %1289 = vmatprep.subr.bf16.mxu0 0
        %1290 = vmatpush1.bf16.xpose.msra.mxu0 0
        %1291 = vmatprep.subr.bf16.mxu0 0
        %1292 = vmatpush1.bf16.xpose.msra.mxu0 0
        %1293 = vmatprep.subr.bf16.mxu0 0
        %1294 = vmatpush1.bf16.xpose.msra.mxu0 %v1277
        %1295 = vmatprep.subr.bf16.mxu0 0
        %1296 = vmatpush2.bf16.xpose.msra.mxu0 0
        %1297 = vmatprep.subr.bf16.mxu0 0
        %1298 = vmatpush2.bf16.xpose.msra.mxu0 0
        %1299 = vmatprep.subr.bf16.mxu0 0
        %1300 = vmatpush2.bf16.xpose.msra.mxu0 0
        %1301 = vmatprep.subr.bf16.mxu0 0
        %1302 = vmatpush2.bf16.xpose.msra.mxu0 0
        %1303 = vmatprep.subr.bf16.mxu0 0
        %1304 = vmatpush2.bf16.xpose.msra.mxu0 0
        %1305 = vmatprep.subr.bf16.mxu0 0
        %1306 = vmatpush2.bf16.xpose.msra.mxu0 0
        %1307 = vmatprep.subr.bf16.mxu0 0
        %1308 = vmatpush2.bf16.xpose.msra.mxu0 0
        %1309 = vmatprep.subr.bf16.mxu0 0
        %1310 = vmatpush2.bf16.xpose.msra.mxu0 0
        %1311 = vmatprep.mubr.bf16.mxu0 0
        %1312 = vmatmul.mubr.bf16.gmra.mxu0 %v1274
        %v1313 = vpop.f32.mrf.mxu0
        %v1314 = vadd.f32 0.0, %v1313
        %v1315 = vpop.f32.mrf.mxu0
        %v1316 = vpop.f32.mrf.mxu0
        %v1317 = vpop.f32.mrf.mxu0
        %1318 = vdwg.mxu0
        %v1320 = vsel %vm1180, %v1175, 0
        %v1323 = vsel %vm1180, %v1179, 0
        %1325 = vmatprep.subr.bf16.mxu0 0
        %1326 = vmatpush1.bf16.xpose.msra.mxu0 0
        %1327 = vmatprep.subr.bf16.mxu0 0
        %1328 = vmatpush1.bf16.xpose.msra.mxu0 0
        %1329 = vmatprep.subr.bf16.mxu0 0
        %1330 = vmatpush1.bf16.xpose.msra.mxu0 0
        %1331 = vmatprep.subr.bf16.mxu0 0
        %1332 = vmatpush1.bf16.xpose.msra.mxu0 0
        %1333 = vmatprep.subr.bf16.mxu0 0
        %1334 = vmatpush1.bf16.xpose.msra.mxu0 0
        %1335 = vmatprep.subr.bf16.mxu0 0
        %1336 = vmatpush1.bf16.xpose.msra.mxu0 0
        %1337 = vmatprep.subr.bf16.mxu0 0
        %1338 = vmatpush1.bf16.xpose.msra.mxu0 0
        %1339 = vmatprep.subr.bf16.mxu0 0
        %1340 = vmatpush1.bf16.xpose.msra.mxu0 %v1323
        %1341 = vmatprep.subr.bf16.mxu0 0
        %1342 = vmatpush2.bf16.xpose.msra.mxu0 0
        %1343 = vmatprep.subr.bf16.mxu0 0
        %1344 = vmatpush2.bf16.xpose.msra.mxu0 0
        %1345 = vmatprep.subr.bf16.mxu0 0
        %1346 = vmatpush2.bf16.xpose.msra.mxu0 0
        %1347 = vmatprep.subr.bf16.mxu0 0
        %1348 = vmatpush2.bf16.xpose.msra.mxu0 0
        %1349 = vmatprep.subr.bf16.mxu0 0
        %1350 = vmatpush2.bf16.xpose.msra.mxu0 0
        %1351 = vmatprep.subr.bf16.mxu0 0
        %1352 = vmatpush2.bf16.xpose.msra.mxu0 0
        %1353 = vmatprep.subr.bf16.mxu0 0
        %1354 = vmatpush2.bf16.xpose.msra.mxu0 0
        %1355 = vmatprep.subr.bf16.mxu0 0
        %1356 = vmatpush2.bf16.xpose.msra.mxu0 0
        %1357 = vmatprep.mubr.bf16.mxu0 0
        %1358 = vmatmul.mubr.bf16.gmra.mxu0 %v1320
        %v1359 = vpop.f32.mrf.mxu0
        %v1360 = vadd.f32 0.0, %v1359
        %v1361 = vpop.f32.mrf.mxu0
        %v1362 = vpop.f32.mrf.mxu0
        %v1363 = vpop.f32.mrf.mxu0
        %1364 = vdwg.mxu0
        %v1365 = vsel %vm1180, %v1222, -inf
        %1366 = vmax.xlane.f32.xlu0 %v1365
        %v1367 = vpop.xlane.xlu0 %1366
        %v1368 = vsel %vm1180, %v1268, -inf
        %1369 = vmax.xlane.f32.xlu0 %v1368
        %v1370 = vpop.xlane.xlu0 %1369
        %v1371 = vsel %vm1180, %v1314, -inf
        %1372 = vmax.xlane.f32.xlu0 %v1371
        %v1373 = vpop.xlane.xlu0 %1372
        %v1374 = vsel %vm1180, %v1360, -inf
        %1375 = vmax.xlane.f32.xlu0 %v1374
        %v1376 = vpop.xlane.xlu0 %1375
        %v1377 = vsub.f32 %v1222, %v1367
        %v1378 = vsub.f32 %v1268, %v1370
        %v1379 = vsub.f32 %v1314, %v1373
        %v1380 = vsub.f32 %v1360, %v1376
        %v1381 = vmul.f32 %v1377, 1.442695
        %v1382 = vpow.pop %v1381
        %v1383 = vmul.f32 %v1378, 1.442695
        %v1384 = vpow.pop %v1383
        %v1385 = vmul.f32 %v1379, 1.442695
        %v1386 = vpow.pop %v1385
        %v1387 = vmul.f32 %v1380, 1.442695
        %v1388 = vpow.pop %v1387
        %v1389 = vsel %vm1180, %v1382, 0.0
        %1390 = vadd.xlane.f32.xlu0 %v1389
        %v1391 = vpop.xlane.xlu0 %1390
        %v1392 = vsel %vm1180, %v1384, 0.0
        %1393 = vadd.xlane.f32.xlu0 %v1392
        %v1394 = vpop.xlane.xlu0 %1393
        %v1395 = vsel %vm1180, %v1386, 0.0
        %1396 = vadd.xlane.f32.xlu0 %v1395
        %v1397 = vpop.xlane.xlu0 %1396
        %v1398 = vsel %vm1180, %v1388, 0.0
        %1399 = vadd.xlane.f32.xlu0 %v1398
        %v1400 = vpop.xlane.xlu0 %1399
        %v1401 = vrcp.pop %v1391
        %v1402 = vrcp.pop %v1394
        %v1403 = vrcp.pop %v1397
        %v1404 = vrcp.pop %v1400
        %v1405 = vmul.f32 %v1382, %v1401
        %v1406 = vmul.f32 %v1384, %v1402
        %v1407 = vmul.f32 %v1386, %v1403
        %v1408 = vmul.f32 %v1388, %v1404
        %v1409 = vpack.c.bf16 %v1405, %v1405
        %v1410 = vpack.c.bf16 %v1406, %v1406
        %v1411 = vpack.c.bf16 %v1407, %v1407
        %v1412 = vpack.c.bf16 %v1408, %v1408
        %v1413 = vpack.c.bf16 %v1011, %v1011
        %v1414 = vpack.c.bf16 %v1063, %v1063
        %v1415 = vpack.c.bf16 %v1115, %v1115
        %v1416 = vpack.c.bf16 %v1167, %v1167
        %v1418 = vsel %vm1180, %v1409, 0
        %vm1420 = vcmask 1043456
        %v1422 = vsel %vm1420, %v1413, 0
        %1424 = vmatprep.subr.bf16.mxu0 0
        %1425 = vmatpush1.bf16.msra.mxu0 0
        %1426 = vmatprep.subr.bf16.mxu0 0
        %1427 = vmatpush1.bf16.msra.mxu0 0
        %1428 = vmatprep.subr.bf16.mxu0 0
        %1429 = vmatpush1.bf16.msra.mxu0 0
        %1430 = vmatprep.subr.bf16.mxu0 0
        %1431 = vmatpush1.bf16.msra.mxu0 0
        %1432 = vmatprep.subr.bf16.mxu0 0
        %1433 = vmatpush1.bf16.msra.mxu0 0
        %1434 = vmatprep.subr.bf16.mxu0 0
        %1435 = vmatpush1.bf16.msra.mxu0 0
        %1436 = vmatprep.subr.bf16.mxu0 0
        %1437 = vmatpush1.bf16.msra.mxu0 0
        %1438 = vmatprep.subr.bf16.mxu0 0
        %1439 = vmatpush1.bf16.msra.mxu0 %v1422
        %1440 = vmatprep.subr.bf16.mxu0 0
        %1441 = vmatpush2.bf16.msra.mxu0 0
        %1442 = vmatprep.subr.bf16.mxu0 0
        %1443 = vmatpush2.bf16.msra.mxu0 0
        %1444 = vmatprep.subr.bf16.mxu0 0
        %1445 = vmatpush2.bf16.msra.mxu0 0
        %1446 = vmatprep.subr.bf16.mxu0 0
        %1447 = vmatpush2.bf16.msra.mxu0 0
        %1448 = vmatprep.subr.bf16.mxu0 0
        %1449 = vmatpush2.bf16.msra.mxu0 0
        %1450 = vmatprep.subr.bf16.mxu0 0
        %1451 = vmatpush2.bf16.msra.mxu0 0
        %1452 = vmatprep.subr.bf16.mxu0 0
        %1453 = vmatpush2.bf16.msra.mxu0 0
        %1454 = vmatprep.subr.bf16.mxu0 0
        %1455 = vmatpush2.bf16.msra.mxu0 0
        %1456 = vmatprep.mubr.bf16.mxu0 0
        %1457 = vmatmul.mubr.bf16.gmra.mxu0 %v1418
        %v1458 = vpop.f32.mrf.mxu0
        %v1459 = vadd.f32 0.0, %v1458
        %v1460 = vpop.f32.mrf.mxu0
        %v1461 = vpop.f32.mrf.mxu0
        %v1462 = vpop.f32.mrf.mxu0
        %1463 = vdwg.mxu0
        %v1465 = vsel %vm1180, %v1410, 0
        %v1468 = vsel %vm1420, %v1414, 0
        %1470 = vmatprep.subr.bf16.mxu0 0
        %1471 = vmatpush1.bf16.msra.mxu0 0
        %1472 = vmatprep.subr.bf16.mxu0 0
        %1473 = vmatpush1.bf16.msra.mxu0 0
        %1474 = vmatprep.subr.bf16.mxu0 0
        %1475 = vmatpush1.bf16.msra.mxu0 0
        %1476 = vmatprep.subr.bf16.mxu0 0
        %1477 = vmatpush1.bf16.msra.mxu0 0
        %1478 = vmatprep.subr.bf16.mxu0 0
        %1479 = vmatpush1.bf16.msra.mxu0 0
        %1480 = vmatprep.subr.bf16.mxu0 0
        %1481 = vmatpush1.bf16.msra.mxu0 0
        %1482 = vmatprep.subr.bf16.mxu0 0
        %1483 = vmatpush1.bf16.msra.mxu0 0
        %1484 = vmatprep.subr.bf16.mxu0 0
        %1485 = vmatpush1.bf16.msra.mxu0 %v1468
        %1486 = vmatprep.subr.bf16.mxu0 0
        %1487 = vmatpush2.bf16.msra.mxu0 0
        %1488 = vmatprep.subr.bf16.mxu0 0
        %1489 = vmatpush2.bf16.msra.mxu0 0
        %1490 = vmatprep.subr.bf16.mxu0 0
        %1491 = vmatpush2.bf16.msra.mxu0 0
        %1492 = vmatprep.subr.bf16.mxu0 0
        %1493 = vmatpush2.bf16.msra.mxu0 0
        %1494 = vmatprep.subr.bf16.mxu0 0
        %1495 = vmatpush2.bf16.msra.mxu0 0
        %1496 = vmatprep.subr.bf16.mxu0 0
        %1497 = vmatpush2.bf16.msra.mxu0 0
        %1498 = vmatprep.subr.bf16.mxu0 0
        %1499 = vmatpush2.bf16.msra.mxu0 0
        %1500 = vmatprep.subr.bf16.mxu0 0
        %1501 = vmatpush2.bf16.msra.mxu0 0
        %1502 = vmatprep.mubr.bf16.mxu0 0
        %1503 = vmatmul.mubr.bf16.gmra.mxu0 %v1465
        %v1504 = vpop.f32.mrf.mxu0
        %v1505 = vadd.f32 0.0, %v1504
        %v1506 = vpop.f32.mrf.mxu0
        %v1507 = vpop.f32.mrf.mxu0
        %v1508 = vpop.f32.mrf.mxu0
        %1509 = vdwg.mxu0
        %v1511 = vsel %vm1180, %v1411, 0
        %v1514 = vsel %vm1420, %v1415, 0
        %1516 = vmatprep.subr.bf16.mxu0 0
        %1517 = vmatpush1.bf16.msra.mxu0 0
        %1518 = vmatprep.subr.bf16.mxu0 0
        %1519 = vmatpush1.bf16.msra.mxu0 0
        %1520 = vmatprep.subr.bf16.mxu0 0
        %1521 = vmatpush1.bf16.msra.mxu0 0
        %1522 = vmatprep.subr.bf16.mxu0 0
        %1523 = vmatpush1.bf16.msra.mxu0 0
        %1524 = vmatprep.subr.bf16.mxu0 0
        %1525 = vmatpush1.bf16.msra.mxu0 0
        %1526 = vmatprep.subr.bf16.mxu0 0
        %1527 = vmatpush1.bf16.msra.mxu0 0
        %1528 = vmatprep.subr.bf16.mxu0 0
        %1529 = vmatpush1.bf16.msra.mxu0 0
        %1530 = vmatprep.subr.bf16.mxu0 0
        %1531 = vmatpush1.bf16.msra.mxu0 %v1514
        %1532 = vmatprep.subr.bf16.mxu0 0
        %1533 = vmatpush2.bf16.msra.mxu0 0
        %1534 = vmatprep.subr.bf16.mxu0 0
        %1535 = vmatpush2.bf16.msra.mxu0 0
        %1536 = vmatprep.subr.bf16.mxu0 0
        %1537 = vmatpush2.bf16.msra.mxu0 0
        %1538 = vmatprep.subr.bf16.mxu0 0
        %1539 = vmatpush2.bf16.msra.mxu0 0
        %1540 = vmatprep.subr.bf16.mxu0 0
        %1541 = vmatpush2.bf16.msra.mxu0 0
        %1542 = vmatprep.subr.bf16.mxu0 0
        %1543 = vmatpush2.bf16.msra.mxu0 0
        %1544 = vmatprep.subr.bf16.mxu0 0
        %1545 = vmatpush2.bf16.msra.mxu0 0
        %1546 = vmatprep.subr.bf16.mxu0 0
        %1547 = vmatpush2.bf16.msra.mxu0 0
        %1548 = vmatprep.mubr.bf16.mxu0 0
        %1549 = vmatmul.mubr.bf16.gmra.mxu0 %v1511
        %v1550 = vpop.f32.mrf.mxu0
        %v1551 = vadd.f32 0.0, %v1550
        %v1552 = vpop.f32.mrf.mxu0
        %v1553 = vpop.f32.mrf.mxu0
        %v1554 = vpop.f32.mrf.mxu0
        %1555 = vdwg.mxu0
        %v1557 = vsel %vm1180, %v1412, 0
        %v1560 = vsel %vm1420, %v1416, 0
        %1562 = vmatprep.subr.bf16.mxu0 0
        %1563 = vmatpush1.bf16.msra.mxu0 0
        %1564 = vmatprep.subr.bf16.mxu0 0
        %1565 = vmatpush1.bf16.msra.mxu0 0
        %1566 = vmatprep.subr.bf16.mxu0 0
        %1567 = vmatpush1.bf16.msra.mxu0 0
        %1568 = vmatprep.subr.bf16.mxu0 0
        %1569 = vmatpush1.bf16.msra.mxu0 0
        %1570 = vmatprep.subr.bf16.mxu0 0
        %1571 = vmatpush1.bf16.msra.mxu0 0
        %1572 = vmatprep.subr.bf16.mxu0 0
        %1573 = vmatpush1.bf16.msra.mxu0 0
        %1574 = vmatprep.subr.bf16.mxu0 0
        %1575 = vmatpush1.bf16.msra.mxu0 0
        %1576 = vmatprep.subr.bf16.mxu0 0
        %1577 = vmatpush1.bf16.msra.mxu0 %v1560
        %1578 = vmatprep.subr.bf16.mxu0 0
        %1579 = vmatpush2.bf16.msra.mxu0 0
        %1580 = vmatprep.subr.bf16.mxu0 0
        %1581 = vmatpush2.bf16.msra.mxu0 0
        %1582 = vmatprep.subr.bf16.mxu0 0
        %1583 = vmatpush2.bf16.msra.mxu0 0
        %1584 = vmatprep.subr.bf16.mxu0 0
        %1585 = vmatpush2.bf16.msra.mxu0 0
        %1586 = vmatprep.subr.bf16.mxu0 0
        %1587 = vmatpush2.bf16.msra.mxu0 0
        %1588 = vmatprep.subr.bf16.mxu0 0
        %1589 = vmatpush2.bf16.msra.mxu0 0
        %1590 = vmatprep.subr.bf16.mxu0 0
        %1591 = vmatpush2.bf16.msra.mxu0 0
        %1592 = vmatprep.subr.bf16.mxu0 0
        %1593 = vmatpush2.bf16.msra.mxu0 0
        %1594 = vmatprep.mubr.bf16.mxu0 0
        %1595 = vmatmul.mubr.bf16.gmra.mxu0 %v1557
        %v1596 = vpop.f32.mrf.mxu0
        %v1597 = vadd.f32 0.0, %v1596
        %v1598 = vpop.f32.mrf.mxu0
        %v1599 = vpop.f32.mrf.mxu0
        %v1600 = vpop.f32.mrf.mxu0
        %1601 = vdwg.mxu0
        %v1602 = vpack.c.bf16 %v1459, %v1459
        %v1603 = vpack.c.bf16 %v1505, %v1505
        %v1604 = vpack.c.bf16 %v1551, %v1551
        %v1605 = vpack.c.bf16 %v1597, %v1597
        %v1606 = vld [vmem:[%s6] sm:$0xf]
        %v1607 = vld [vmem:[%s6 + $0x4] sm:$0xf]
        %v1608 = vld [vmem:[%s6 + $0x8] sm:$0xf]
        %v1609 = vld [vmem:[%s6 + $0xc] sm:$0xf]
        %v1611 = vsel %vm1180, %v1602, 0
        %v1614 = vsel %vm1420, %v1606, 0
        %1616 = vmatprep.subr.bf16.mxu0 0
        %1617 = vmatpush1.bf16.msra.mxu0 0
        %1618 = vmatprep.subr.bf16.mxu0 0
        %1619 = vmatpush1.bf16.msra.mxu0 0
        %1620 = vmatprep.subr.bf16.mxu0 0
        %1621 = vmatpush1.bf16.msra.mxu0 0
        %1622 = vmatprep.subr.bf16.mxu0 0
        %1623 = vmatpush1.bf16.msra.mxu0 0
        %1624 = vmatprep.subr.bf16.mxu0 0
        %1625 = vmatpush1.bf16.msra.mxu0 0
        %1626 = vmatprep.subr.bf16.mxu0 0
        %1627 = vmatpush1.bf16.msra.mxu0 0
        %1628 = vmatprep.subr.bf16.mxu0 0
        %1629 = vmatpush1.bf16.msra.mxu0 0
        %1630 = vmatprep.subr.bf16.mxu0 0
        %1631 = vmatpush1.bf16.msra.mxu0 %v1614
        %1632 = vmatprep.subr.bf16.mxu0 0
        %1633 = vmatpush2.bf16.msra.mxu0 0
        %1634 = vmatprep.subr.bf16.mxu0 0
        %1635 = vmatpush2.bf16.msra.mxu0 0
        %1636 = vmatprep.subr.bf16.mxu0 0
        %1637 = vmatpush2.bf16.msra.mxu0 0
        %1638 = vmatprep.subr.bf16.mxu0 0
        %1639 = vmatpush2.bf16.msra.mxu0 0
        %1640 = vmatprep.subr.bf16.mxu0 0
        %1641 = vmatpush2.bf16.msra.mxu0 0
        %1642 = vmatprep.subr.bf16.mxu0 0
        %1643 = vmatpush2.bf16.msra.mxu0 0
        %1644 = vmatprep.subr.bf16.mxu0 0
        %1645 = vmatpush2.bf16.msra.mxu0 0
        %1646 = vmatprep.subr.bf16.mxu0 0
        %1647 = vmatpush2.bf16.msra.mxu0 0
        %1648 = vmatprep.mubr.bf16.mxu0 0
        %1649 = vmatmul.mubr.bf16.gmra.mxu0 %v1611
        %v1650 = vpop.f32.mrf.mxu0
        %v1651 = vadd.f32 0.0, %v1650
        %v1652 = vpop.f32.mrf.mxu0
        %v1653 = vpop.f32.mrf.mxu0
        %v1654 = vpop.f32.mrf.mxu0
        %1655 = vdwg.mxu0
        %v1657 = vsel %vm1180, %v1603, 0
        %v1660 = vsel %vm1420, %v1607, 0
        %1662 = vmatprep.subr.bf16.mxu0 0
        %1663 = vmatpush1.bf16.msra.mxu0 0
        %1664 = vmatprep.subr.bf16.mxu0 0
        %1665 = vmatpush1.bf16.msra.mxu0 0
        %1666 = vmatprep.subr.bf16.mxu0 0
        %1667 = vmatpush1.bf16.msra.mxu0 0
        %1668 = vmatprep.subr.bf16.mxu0 0
        %1669 = vmatpush1.bf16.msra.mxu0 0
        %1670 = vmatprep.subr.bf16.mxu0 0
        %1671 = vmatpush1.bf16.msra.mxu0 0
        %1672 = vmatprep.subr.bf16.mxu0 0
        %1673 = vmatpush1.bf16.msra.mxu0 0
        %1674 = vmatprep.subr.bf16.mxu0 0
        %1675 = vmatpush1.bf16.msra.mxu0 0
        %1676 = vmatprep.subr.bf16.mxu0 0
        %1677 = vmatpush1.bf16.msra.mxu0 %v1660
        %1678 = vmatprep.subr.bf16.mxu0 0
        %1679 = vmatpush2.bf16.msra.mxu0 0
        %1680 = vmatprep.subr.bf16.mxu0 0
        %1681 = vmatpush2.bf16.msra.mxu0 0
        %1682 = vmatprep.subr.bf16.mxu0 0
        %1683 = vmatpush2.bf16.msra.mxu0 0
        %1684 = vmatprep.subr.bf16.mxu0 0
        %1685 = vmatpush2.bf16.msra.mxu0 0
        %1686 = vmatprep.subr.bf16.mxu0 0
        %1687 = vmatpush2.bf16.msra.mxu0 0
        %1688 = vmatprep.subr.bf16.mxu0 0
        %1689 = vmatpush2.bf16.msra.mxu0 0
        %1690 = vmatprep.subr.bf16.mxu0 0
        %1691 = vmatpush2.bf16.msra.mxu0 0
        %1692 = vmatprep.subr.bf16.mxu0 0
        %1693 = vmatpush2.bf16.msra.mxu0 0
        %1694 = vmatprep.mubr.bf16.mxu0 0
        %1695 = vmatmul.mubr.bf16.gmra.mxu0 %v1657
        %v1696 = vpop.f32.mrf.mxu0
        %v1697 = vadd.f32 0.0, %v1696
        %v1698 = vpop.f32.mrf.mxu0
        %v1699 = vpop.f32.mrf.mxu0
        %v1700 = vpop.f32.mrf.mxu0
        %1701 = vdwg.mxu0
        %v1703 = vsel %vm1180, %v1604, 0
        %v1706 = vsel %vm1420, %v1608, 0
        %1708 = vmatprep.subr.bf16.mxu0 0
        %1709 = vmatpush1.bf16.msra.mxu0 0
        %1710 = vmatprep.subr.bf16.mxu0 0
        %1711 = vmatpush1.bf16.msra.mxu0 0
        %1712 = vmatprep.subr.bf16.mxu0 0
        %1713 = vmatpush1.bf16.msra.mxu0 0
        %1714 = vmatprep.subr.bf16.mxu0 0
        %1715 = vmatpush1.bf16.msra.mxu0 0
        %1716 = vmatprep.subr.bf16.mxu0 0
        %1717 = vmatpush1.bf16.msra.mxu0 0
        %1718 = vmatprep.subr.bf16.mxu0 0
        %1719 = vmatpush1.bf16.msra.mxu0 0
        %1720 = vmatprep.subr.bf16.mxu0 0
        %1721 = vmatpush1.bf16.msra.mxu0 0
        %1722 = vmatprep.subr.bf16.mxu0 0
        %1723 = vmatpush1.bf16.msra.mxu0 %v1706
        %1724 = vmatprep.subr.bf16.mxu0 0
        %1725 = vmatpush2.bf16.msra.mxu0 0
        %1726 = vmatprep.subr.bf16.mxu0 0
        %1727 = vmatpush2.bf16.msra.mxu0 0
        %1728 = vmatprep.subr.bf16.mxu0 0
        %1729 = vmatpush2.bf16.msra.mxu0 0
        %1730 = vmatprep.subr.bf16.mxu0 0
        %1731 = vmatpush2.bf16.msra.mxu0 0
        %1732 = vmatprep.subr.bf16.mxu0 0
        %1733 = vmatpush2.bf16.msra.mxu0 0
        %1734 = vmatprep.subr.bf16.mxu0 0
        %1735 = vmatpush2.bf16.msra.mxu0 0
        %1736 = vmatprep.subr.bf16.mxu0 0
        %1737 = vmatpush2.bf16.msra.mxu0 0
        %1738 = vmatprep.subr.bf16.mxu0 0
        %1739 = vmatpush2.bf16.msra.mxu0 0
        %1740 = vmatprep.mubr.bf16.mxu0 0
        %1741 = vmatmul.mubr.bf16.gmra.mxu0 %v1703
        %v1742 = vpop.f32.mrf.mxu0
        %v1743 = vadd.f32 0.0, %v1742
        %v1744 = vpop.f32.mrf.mxu0
        %v1745 = vpop.f32.mrf.mxu0
        %v1746 = vpop.f32.mrf.mxu0
        %1747 = vdwg.mxu0
        %v1749 = vsel %vm1180, %v1605, 0
        %v1752 = vsel %vm1420, %v1609, 0
        %1754 = vmatprep.subr.bf16.mxu0 0
        %1755 = vmatpush1.bf16.msra.mxu0 0
        %1756 = vmatprep.subr.bf16.mxu0 0
        %1757 = vmatpush1.bf16.msra.mxu0 0
        %1758 = vmatprep.subr.bf16.mxu0 0
        %1759 = vmatpush1.bf16.msra.mxu0 0
        %1760 = vmatprep.subr.bf16.mxu0 0
        %1761 = vmatpush1.bf16.msra.mxu0 0
        %1762 = vmatprep.subr.bf16.mxu0 0
        %1763 = vmatpush1.bf16.msra.mxu0 0
        %1764 = vmatprep.subr.bf16.mxu0 0
        %1765 = vmatpush1.bf16.msra.mxu0 0
        %1766 = vmatprep.subr.bf16.mxu0 0
        %1767 = vmatpush1.bf16.msra.mxu0 0
        %1768 = vmatprep.subr.bf16.mxu0 0
        %1769 = vmatpush1.bf16.msra.mxu0 %v1752
        %1770 = vmatprep.subr.bf16.mxu0 0
        %1771 = vmatpush2.bf16.msra.mxu0 0
        %1772 = vmatprep.subr.bf16.mxu0 0
        %1773 = vmatpush2.bf16.msra.mxu0 0
        %1774 = vmatprep.subr.bf16.mxu0 0
        %1775 = vmatpush2.bf16.msra.mxu0 0
        %1776 = vmatprep.subr.bf16.mxu0 0
        %1777 = vmatpush2.bf16.msra.mxu0 0
        %1778 = vmatprep.subr.bf16.mxu0 0
        %1779 = vmatpush2.bf16.msra.mxu0 0
        %1780 = vmatprep.subr.bf16.mxu0 0
        %1781 = vmatpush2.bf16.msra.mxu0 0
        %1782 = vmatprep.subr.bf16.mxu0 0
        %1783 = vmatpush2.bf16.msra.mxu0 0
        %1784 = vmatprep.subr.bf16.mxu0 0
        %1785 = vmatpush2.bf16.msra.mxu0 0
        %1786 = vmatprep.mubr.bf16.mxu0 0
        %1787 = vmatmul.mubr.bf16.gmra.mxu0 %v1749
        %v1788 = vpop.f32.mrf.mxu0
        %v1789 = vadd.f32 0.0, %v1788
        %v1790 = vpop.f32.mrf.mxu0
        %v1791 = vpop.f32.mrf.mxu0
        %v1792 = vpop.f32.mrf.mxu0
        %1793 = vdwg.mxu0
        %v1794 = vsel %vm467, %v1651, 0.0
        %v1795 = vsel %vm467, %v1697, 0.0
        %v1796 = vadd.f32 %v1794, %v1795
        %v1797 = vsel %vm467, %v1743, 0.0
        %v1798 = vadd.f32 %v1796, %v1797
        %v1799 = vsel %vm467, %v1789, 0.0
        %v1800 = vadd.f32 %v1798, %v1799
        %v1801 = vld [vmem:[%s7] sm:$0x1]
        %v1803 = vlaneseq
        %v1804 = vshrl.u32 %v1803, 7
        %v1805 = vsub.s32 0, %v1804
        %v1806 = vrot.slane %v1801, %v1805
        %v1808 = vadd.f32 %v1800, %v1806
        %v1809 = vadd.f32 %v464, %v1808
        %v1810 = vld [vmem:[%s8] sm:$0x1]
        %v1811 = vld [vmem:[%s9] sm:$0x1]
        %v1812 = vsel %vm467, %v1809, 0.0
        %1813 = vadd.xlane.f32.xlu0 %v1812
        %v1814 = vpop.xlane.xlu0 %1813
        %v1815 = vmul.f32 %v1814, %v471
        %v1816 = vsub.f32 %v1809, %v1815
        %v1817 = vmul.f32 %v1816, %v1816
        %v1818 = vsel %vm467, %v1817, 0.0
        %1819 = vadd.xlane.f32.xlu0 %v1818
        %v1820 = vpop.xlane.xlu0 %1819
        %v1821 = vmul.f32 %v1820, %v471
        %v1822 = vadd.f32 %v1821, 1e-05
        %v1823 = vrsqrt.pop %v1822
        %v1824 = vmul.f32 %v1816, %v1823
        %v1826 = vlaneseq
        %v1827 = vshrl.u32 %v1826, 7
        %v1828 = vsub.s32 0, %v1827
        %v1829 = vrot.slane %v1810, %v1828
        %v1831 = vmul.f32 %v1824, %v1829
        %v1833 = vlaneseq
        %v1834 = vshrl.u32 %v1833, 7
        %v1835 = vsub.s32 0, %v1834
        %v1836 = vrot.slane %v1811, %v1835
        %v1838 = vadd.f32 %v1831, %v1836
        %v1839 = vpack.c.bf16 %v1838, %v1838
        %v1840 = vld [vmem:[%s10] sm:$0xf]
        %v1841 = vld [vmem:[%s10 + $0x4] sm:$0xf]
        %v1842 = vld [vmem:[%s10 + $0x8] sm:$0xf]
        %v1843 = vld [vmem:[%s10 + $0xc] sm:$0xf]
        %v1844 = vld [vmem:[%s11] sm:$0x1]
        %v1846 = vlaneseq
        %v1847 = vshrl.u32 %v1846, 7
        %v1848 = vsub.s32 0, %v1847
        %v1849 = vrot.slane %v1844, %v1848
        %v1855 = vunpack.c.l.b16 %v1840
        %v1856 = vunpack.c.l.b16 %v1841
        %v1857 = vunpack.c.l.b16 %v1842
        %v1858 = vunpack.c.l.b16 %v1843
        %v1859 = vpack.c.b16 %v1856, %v1855
        %v1860 = vpack.c.b16 %v1858, %v1857
        %v1864 = vsel %vm467, %v1839, 0
        %1866 = vmatprep.subr.bf16.mxu0 0
        %1867 = vmatpush1.bf16.msra.mxu0 0
        %1868 = vmatprep.subr.bf16.mxu0 0
        %1869 = vmatpush1.bf16.msra.mxu0 0
        %1870 = vmatprep.subr.bf16.mxu0 0
        %1871 = vmatpush1.bf16.msra.mxu0 0
        %1872 = vmatprep.subr.bf16.mxu0 0
        %1873 = vmatpush1.bf16.msra.mxu0 0
        %1874 = vmatprep.subr.bf16.mxu0 0
        %1875 = vmatpush1.bf16.msra.mxu0 0
        %1876 = vmatprep.subr.bf16.mxu0 0
        %1877 = vmatpush1.bf16.msra.mxu0 0
        %1878 = vmatprep.subr.bf16.mxu0 0
        %1879 = vmatpush1.bf16.msra.mxu0 %v1860
        %1880 = vmatprep.subr.bf16.mxu0 0
        %1881 = vmatpush1.bf16.msra.mxu0 %v1859
        %1882 = vmatprep.subr.bf16.mxu0 0
        %1883 = vmatpush2.bf16.msra.mxu0 0
        %1884 = vmatprep.subr.bf16.mxu0 0
        %1885 = vmatpush2.bf16.msra.mxu0 0
        %1886 = vmatprep.subr.bf16.mxu0 0
        %1887 = vmatpush2.bf16.msra.mxu0 0
        %1888 = vmatprep.subr.bf16.mxu0 0
        %1889 = vmatpush2.bf16.msra.mxu0 0
        %1890 = vmatprep.subr.bf16.mxu0 0
        %1891 = vmatpush2.bf16.msra.mxu0 0
        %1892 = vmatprep.subr.bf16.mxu0 0
        %1893 = vmatpush2.bf16.msra.mxu0 0
        %1894 = vmatprep.subr.bf16.mxu0 0
        %1895 = vmatpush2.bf16.msra.mxu0 0
        %1896 = vmatprep.subr.bf16.mxu0 0
        %1897 = vmatpush2.bf16.msra.mxu0 0
        %1898 = vmatprep.mubr.bf16.mxu0 0
        %1899 = vmatmul.mubr.bf16.gmra.mxu0 %v1864
        %v1900 = vpop.f32.mrf.mxu0
        %v1901 = vadd.f32 %v1849, %v1900
        %v1902 = vpop.f32.mrf.mxu0
        %v1903 = vpop.f32.mrf.mxu0
        %v1904 = vpop.f32.mrf.mxu0
        %1905 = vdwg.mxu0
        %v1906 = vmul.f32 %v1901, 0.5
        %v1907 = vmul.f32 %v1901, 0.70710677
        %v1908 = verf.f32.pop %v1907
        %v1909 = vadd.f32 %v1908, 1.0
        %v1910 = vmul.f32 %v1906, %v1909
        %v1911 = vpack.c.bf16 %v1910, %v1910
        %v1912 = vld [vmem:[%s12] sm:$0xf]
        %v1913 = vld [vmem:[%s12 + $0x4] sm:$0xf]
        %v1914 = vld [vmem:[%s12 + $0x8] sm:$0xf]
        %v1915 = vld [vmem:[%s12 + $0xc] sm:$0xf]
        %v1916 = vld [vmem:[%s12 + $0x10] sm:$0xf]
        %v1917 = vld [vmem:[%s12 + $0x14] sm:$0xf]
        %v1918 = vld [vmem:[%s12 + $0x18] sm:$0xf]
        %v1919 = vld [vmem:[%s12 + $0x1c] sm:$0xf]
        %v1920 = vld [vmem:[%s12 + $0x20] sm:$0xf]
        %v1921 = vld [vmem:[%s12 + $0x24] sm:$0xf]
        %v1922 = vld [vmem:[%s12 + $0x28] sm:$0xf]
        %v1923 = vld [vmem:[%s12 + $0x2c] sm:$0xf]
        %v1924 = vld [vmem:[%s12 + $0x30] sm:$0xf]
        %v1925 = vld [vmem:[%s12 + $0x34] sm:$0xf]
        %v1926 = vld [vmem:[%s12 + $0x38] sm:$0xf]
        %v1927 = vld [vmem:[%s12 + $0x3c] sm:$0xf]
        %v1928 = vld [vmem:[%s13] sm:$0x1]
        %v1930 = vlaneseq
        %v1931 = vshrl.u32 %v1930, 7
        %v1932 = vsub.s32 0, %v1931
        %v1933 = vrot.slane %v1928, %v1932
        %v1951 = vunpack.c.l.b16 %v1912
        %v1952 = vunpack.c.l.b16 %v1913
        %v1953 = vunpack.c.l.b16 %v1914
        %v1954 = vunpack.c.l.b16 %v1915
        %v1955 = vunpack.c.l.b16 %v1916
        %v1956 = vunpack.c.l.b16 %v1917
        %v1957 = vunpack.c.l.b16 %v1918
        %v1958 = vunpack.c.l.b16 %v1919
        %v1959 = vunpack.c.l.b16 %v1920
        %v1960 = vunpack.c.l.b16 %v1921
        %v1961 = vunpack.c.l.b16 %v1922
        %v1962 = vunpack.c.l.b16 %v1923
        %v1963 = vunpack.c.l.b16 %v1924
        %v1964 = vunpack.c.l.b16 %v1925
        %v1965 = vunpack.c.l.b16 %v1926
        %v1966 = vunpack.c.l.b16 %v1927
        %v1967 = vpack.c.b16 %v1952, %v1951
        %v1968 = vpack.c.b16 %v1954, %v1953
        %v1969 = vpack.c.b16 %v1956, %v1955
        %v1970 = vpack.c.b16 %v1958, %v1957
        %v1971 = vpack.c.b16 %v1960, %v1959
        %v1972 = vpack.c.b16 %v1962, %v1961
        %v1973 = vpack.c.b16 %v1964, %v1963
        %v1974 = vpack.c.b16 %v1966, %v1965
        %1983 = vmatprep.subr.bf16.mxu0 0
        %1984 = vmatpush1.bf16.msra.mxu0 %v1974
        %1985 = vmatprep.subr.bf16.mxu0 0
        %1986 = vmatpush1.bf16.msra.mxu0 %v1973
        %1987 = vmatprep.subr.bf16.mxu0 0
        %1988 = vmatpush1.bf16.msra.mxu0 %v1972
        %1989 = vmatprep.subr.bf16.mxu0 0
        %1990 = vmatpush1.bf16.msra.mxu0 %v1971
        %1991 = vmatprep.subr.bf16.mxu0 0
        %1992 = vmatpush1.bf16.msra.mxu0 %v1970
        %1993 = vmatprep.subr.bf16.mxu0 0
        %1994 = vmatpush1.bf16.msra.mxu0 %v1969
        %1995 = vmatprep.subr.bf16.mxu0 0
        %1996 = vmatpush1.bf16.msra.mxu0 %v1968
        %1997 = vmatprep.subr.bf16.mxu0 0
        %1998 = vmatpush1.bf16.msra.mxu0 %v1967
        %1999 = vmatprep.subr.bf16.mxu0 0
        %2000 = vmatpush2.bf16.msra.mxu0 0
        %2001 = vmatprep.subr.bf16.mxu0 0
        %2002 = vmatpush2.bf16.msra.mxu0 0
        %2003 = vmatprep.subr.bf16.mxu0 0
        %2004 = vmatpush2.bf16.msra.mxu0 0
        %2005 = vmatprep.subr.bf16.mxu0 0
        %2006 = vmatpush2.bf16.msra.mxu0 0
        %2007 = vmatprep.subr.bf16.mxu0 0
        %2008 = vmatpush2.bf16.msra.mxu0 0
        %2009 = vmatprep.subr.bf16.mxu0 0
        %2010 = vmatpush2.bf16.msra.mxu0 0
        %2011 = vmatprep.subr.bf16.mxu0 0
        %2012 = vmatpush2.bf16.msra.mxu0 0
        %2013 = vmatprep.subr.bf16.mxu0 0
        %2014 = vmatpush2.bf16.msra.mxu0 0
        %2015 = vmatprep.mubr.bf16.mxu0 0
        %2016 = vmatmul.mubr.bf16.gmra.mxu0 %v1911
        %v2017 = vpop.f32.mrf.mxu0
        %v2018 = vadd.f32 %v1933, %v2017
        %v2019 = vpop.f32.mrf.mxu0
        %v2020 = vpop.f32.mrf.mxu0
        %v2021 = vpop.f32.mrf.mxu0
        %2022 = vdwg.mxu0
        %v2023 = vadd.f32 %v1809, %v2018
        %2024 = vst.msk [vmem:[%s458] sm:$0xff] %vm467, %v2023
        %s2025 = sand.u32 %s335, 1
        %s2026 = scalar_lea.sflag [#allocation3], %s2025
        %s2027 = sand.u32 %s335, 1
        %s2028 = smul.addr %s2027, 8
        %s2029 = scalar_lea.vmem [#allocation2], %s2028
        // Predicated region
        $region77: #{tpu_custom_call.1} parent=75 // pred_check
          %p2030 = pneg %p345
        $region78: #{tpu_custom_call.1} parent=75 // pred_check_branch
          %2032 = sbr.rel (%p2030) target = $region80
        $region79: #{tpu_custom_call.1} parent=75 // pred_region
          %s2034 = ssub.s32 128, 128
          %2035 = vsyncadd %s2026, %s2034
          %s2036 = smul.addr %s28, 128
          %s2037 = scalar_lea.hbm %s14, %s2036
          %s2039 = sshll.u32 %s2029, 4
          %s2040 = int_to_ptr.vmem [resolvable:$true] %s2039
          %2042 = dma.vmem_to_hbm [thread:$0]  %s2040, 128, %s2037, %s2026
        $region80: #{tpu_custom_call.1} parent=75 // pred_fallthru
          _
      $region76: #{tpu_custom_call.1} parent=5 // pred_fallthru
        _
      %p2043 = scmp.le.s32.totalorder 2, %s23
      // Predicated region
      $region81: #{tpu_custom_call.1} parent=5 // pred_check
        %p2044 = pneg %p2043
      $region82: #{tpu_custom_call.1} parent=5 // pred_check_branch
        %2046 = sbr.rel (%p2044) target = $region84
      $region83: #{tpu_custom_call.1} parent=5 // pred_region
        %s2047 = ssub.s32 %s23, 2
        // Predicated region
        $region85: #{tpu_custom_call.1} parent=83 // pred_check
          %p2048 = pneg %p351
        $region86: #{tpu_custom_call.1} parent=83 // pred_check_branch
          %2050 = sbr.rel (%p2048) target = $region88
        $region87: #{tpu_custom_call.1} parent=83 // pred_region
          %s2051 = sand.u32 %s336, 1
          %s2052 = scalar_lea.sflag [#allocation3], %s2051
          %s2053 = sand.u32 %s336, 1
          %s2054 = smul.addr %s2053, 8
          %s2055 = scalar_lea.vmem [#allocation2], %s2054
          %2056 = dma.done %s2052, 128
        $region88: #{tpu_custom_call.1} parent=83 // pred_fallthru
          _
      $region84: #{tpu_custom_call.1} parent=5 // pred_fallthru
        _
    $region6: #{tpu_custom_call.1} parent=1 // loop_footer
      %s27 = sadd.s32 1, %s23
    $region7: #{tpu_custom_call.1} parent=1 // loop_footer_branch
      %22 = sbr.rel target = $region3
    $region8: #{tpu_custom_call.1} parent=1 // loop_exit
      _
    %2057 = vsyncpa [#allocation3], 1
    %s2058 = scalar_lea.sflag [#allocation3], 1
    %2059 = vsyncpa %s2058, 1

</llo_original>
